<compile_context>
chip_gen: v7x
topology: tpu7x:2x2x1
jax: 0.10.0
libtpu: 0.0.40
codegen_flags: <defaults>
</compile_context>

<pallas_src>
import functools
import math

import jax
import jax.numpy as jnp
from jax import lax
from jax.experimental import pallas as pl
from jax.experimental.pallas import tpu as pltpu

EPS = 1e-5
GROWTH = 12
NBLOCKS = (2, 2, 2)
NSTRIDE = (1, 1, 1)           # dense-block conv stride; must stay 1 for the roll-based taps
REDUCTION = 0.5
NUM_CLASSES = 2
MXU_DTYPE = jnp.bfloat16      # matmul operand dtype; set jnp.float32 for bit-closer parity

CH_PAD = 16    # every channel count padded to a multiple of 16 (bf16 sublane tile):
               # all sublane concats / slices / stores are tile-aligned on every TPU gen
TAP_PAD = 16   # per-tap row stride in the M-stacked k=3 conv weight
PANEL = 128    # lane width of one weight panel inside the packed weight slab


def _rup(x, m):
    return ((x + m - 1) // m) * m


# ---------------------------------------------------------------------------
# Static plan (pure Python, module-level) shared by the packer and the kernel.
# ---------------------------------------------------------------------------
def _make_plan():
    assert NSTRIDE == (1, 1, 1), "roll-based k=3 taps require stride-1 dense convs"
    assert _rup(GROWTH, CH_PAD) == TAP_PAD
    c0 = 2 * GROWTH
    plan = {"stem": {"panel": 0, "rows": _rup(c0, CH_PAD), "c_real": c0}}
    stages, panel, bn, num_planes = [], 1, 0, c0
    max_cpad = plan["stem"]["rows"]
    for s in range(3):
        blocks, chunks = [], []
        cin_real, cin_pad = num_planes, _rup(num_planes, CH_PAD)
        chunks.append((cin_real, cin_pad))
        for _ in range(NBLOCKS[s]):
            blocks.append({"panel": panel, "bn": bn, "cin_real": cin_real,
                           "cin_pad": cin_pad, "cout_pad": _rup(GROWTH, CH_PAD)})
            panel += 1
            bn += 1
            cin_real, cin_pad = GROWTH, _rup(GROWTH, CH_PAD)
            chunks.append((cin_real, cin_pad))
            max_cpad = max(max_cpad, _rup(GROWTH, CH_PAD))
        num_planes += NBLOCKS[s] * GROWTH
        out_planes = int(math.floor(num_planes * REDUCTION))
        trans = {"panel": panel, "bn": bn, "chunks": chunks,
                 "cin_pad": sum(cp for _, cp in chunks),
                 "cout_real": out_planes, "cout_pad": _rup(out_planes, CH_PAD)}
        panel += 1
        bn += 1
        max_cpad = max(max_cpad, trans["cout_pad"])
        stages.append({"blocks": blocks, "trans": trans})
        num_planes = out_planes
    plan["stages"] = stages
    plan["head_bn"] = bn
    plan["n_bn"] = bn + 1
    plan["c_final_real"] = num_planes
    plan["c_final_pad"] = _rup(num_planes, CH_PAD)
    plan["n_panels"] = panel
    plan["out_rows"] = _rup(max(max_cpad, plan["c_final_pad"],
                                num_planes + NUM_CLASSES), 8)
    # f32 param slab column layout: [A (pool/linear) | bias | gamma/beta pairs]
    plan["a_col"] = 0
    plan["bias_col"] = plan["c_final_pad"]
    plan["bn_col0"] = plan["bias_col"] + 1
    plan["f_cols"] = plan["bn_col0"] + 2 * plan["n_bn"]
    return plan


PLAN = _make_plan()


# ---------------------------------------------------------------------------
# Fused Pallas kernel: the whole forward pass, everything resident in VMEM/vregs.
# ---------------------------------------------------------------------------
def _densenet_kernel(masks_ref, pool_ref, p1_ref, w_ref, f_ref, out_ref, *,
                     plan, padl, inv_count, mxu_dtype):
    f32 = jnp.float32
    vmask = masks_ref[0:1, :]        # 1.0 on valid (n, t) lanes
    lmask = masks_ref[1:2, :]        # 1.0 where a left neighbour exists (t > 0, valid)
    rmask = masks_ref[2:3, :]        # 1.0 where a right neighbour exists (t < L0-1, valid)

    def wslice(panel, rows, cols):
        c0 = panel * PANEL
        return w_ref[0:rows, c0:c0 + cols]

    def bn_relu(y, k, cpad):
        # Training-mode BatchNorm1d (biased variance over the N*L0 valid lanes) + ReLU,
        # then re-zero the padded lanes.  Padded lanes/rows of y are exactly zero, so
        # plain whole-row sums are valid-only sums.
        s1 = jnp.sum(y, axis=1, keepdims=True)
        s2 = jnp.sum(y * y, axis=1, keepdims=True)
        mean = s1 * inv_count
        var = jnp.maximum(s2 * inv_count - mean * mean, 0.0)   # guard f32 cancellation
        col = plan["bn_col0"] + 2 * k
        g = f_ref[0:cpad, col:col + 1]
        b = f_ref[0:cpad, col + 1:col + 2]
        out = (y - mean) * lax.rsqrt(var + EPS) * g + b
        return jnp.maximum(out, 0.0) * vmask

    # --- stem: Conv1d(1, 2*growth, k=7, stride=2, bias=False); no BN/ReLU in reference ---
    stem = plan["stem"]
    h = jnp.dot(wslice(stem["panel"], stem["rows"], 7), p1_ref[...],
                preferred_element_type=f32)                           # (32, PADL) f32

    # --- dense stages + 1x1 transitions ---
    for stage in plan["stages"]:
        hm = h.astype(mxu_dtype)
        feats = [hm]
        xm = hm
        for blk in stage["blocks"]:
            # k=3 / stride-1 / pad-1 conv as ONE MXU matmul: the three taps' weights are
            # stacked along M (16-row aligned); the left/right taps are recovered from the
            # single product with lane rolls (XLU) + boundary masks (f32, v5e-safe).
            w = wslice(blk["panel"], 3 * TAP_PAD, blk["cin_pad"])
            y3 = jnp.dot(w, xm, preferred_element_type=f32)           # (48, PADL) f32
            yl = pltpu.roll(y3[0:TAP_PAD, :], shift=1, axis=1) * lmask
            yc = y3[TAP_PAD:2 * TAP_PAD, :]
            yr = pltpu.roll(y3[2 * TAP_PAD:3 * TAP_PAD, :],
                            shift=padl - 1, axis=1) * rmask
            x = bn_relu(yl + yc + yr, blk["bn"], blk["cout_pad"])     # (16, PADL) f32
            xm = x.astype(mxu_dtype)                                  # single cast per block
            feats.append(xm)
        # transition: 1x1 conv over torch.cat(feats, channels) as ONE matmul.  The concat
        # is register-level along sublanes at 16-aligned offsets (0, 32, 48); the weight
        # slab has matching zero columns at the channel-padding rows.
        tr = stage["trans"]
        cat = jnp.concatenate(feats, axis=0)                          # (64, PADL) mxu dtype
        wt = wslice(tr["panel"], tr["cout_pad"], tr["cin_pad"])
        h = bn_relu(jnp.dot(wt, cat, preferred_element_type=f32),
                    tr["bn"], tr["cout_pad"])                         # (32, PADL) f32

    # --- head: BN + ReLU + adaptive_avg_pool1d(1) + Linear, folded into two f32 matmuls.
    # a_mat rows 0..23 = identity (-> pooled features), rows 24..25 = Linear weight
    # (-> logits); pool_ref is the (PADL, PADN) averaging matrix.  One lane-dense store.
    yh = bn_relu(h, plan["head_bn"], plan["c_final_pad"])             # (32, PADL)
    a_mat = f_ref[:, plan["a_col"]:plan["a_col"] + plan["c_final_pad"]]   # (32, 32)
    bias = f_ref[:, plan["bias_col"]:plan["bias_col"] + 1]                # (32, 1)
    tmp = jnp.dot(a_mat, yh, preferred_element_type=f32)              # (32, PADL)
    out_ref[...] = jnp.dot(tmp, pool_ref[...], preferred_element_type=f32) + bias


def _full_spec(a):
    nd = a.ndim
    return pl.BlockSpec(a.shape, lambda *_, nd=nd: (0,) * nd)


# ---------------------------------------------------------------------------
# One-time host-side staging (hoisted out of the per-call path).
# ---------------------------------------------------------------------------
def pack_params(params, mxu_dtype=MXU_DTYPE):
    """Pack every parameter into two slabs: a bf16 weight slab (one 128-lane panel per
    layer, M-stacked k=3 taps, channel-padded transition weights) and one f32 slab
    ([pool/linear matrix | linear bias | BN gamma/beta columns])."""
    plan = PLAN
    w = jnp.zeros((3 * TAP_PAD, PANEL * plan["n_panels"]), jnp.float32)
    w = w.at[0:plan["stem"]["c_real"], 0:7].set(params["conv1_w"][:, 0, :])
    bn_list = []
    for s, stage in enumerate(plan["stages"]):
        for b, blk in enumerate(stage["blocks"]):
            p = params[f"dense{s + 1}"][b]
            c0 = blk["panel"] * PANEL
            for j in range(3):                       # tap j at row offset j*TAP_PAD
                w = w.at[j * TAP_PAD:j * TAP_PAD + GROWTH,
                         c0:c0 + blk["cin_real"]].set(p["w"][:, :, j])
            bn_list.append((p["gamma"], p["beta"]))
        tr = stage["trans"]
        tp = params[f"trans{s + 1}"]
        tw = tp["w"][:, :, 0]                        # (cout_real, sum(real chunks))
        c0 = tr["panel"] * PANEL
        src = dst = 0
        for creal, cpad in tr["chunks"]:             # scatter into channel-padded columns
            w = w.at[0:tr["cout_real"], c0 + dst:c0 + dst + creal].set(
                tw[:, src:src + creal])
            src += creal
            dst += cpad
        bn_list.append((tp["gamma"], tp["beta"]))
    bn_list.append((params["bn_gamma"], params["bn_beta"]))

    f = jnp.zeros((plan["out_rows"], plan["f_cols"]), jnp.float32)
    for k, (g, b) in enumerate(bn_list):
        c = g.shape[0]
        col = plan["bn_col0"] + 2 * k
        f = f.at[0:c, col].set(g)
        f = f.at[0:c, col + 1].set(b)
    cfr = plan["c_final_real"]
    f = f.at[0:cfr, plan["a_col"]:plan["a_col"] + cfr].set(jnp.eye(cfr, dtype=jnp.float32))
    f = f.at[cfr:cfr + NUM_CLASSES, plan["a_col"]:plan["a_col"] + cfr].set(params["lin_w"])
    f = f.at[cfr:cfr + NUM_CLASSES, plan["bias_col"]].set(params["lin_b"])
    return {"w": w.astype(mxu_dtype), "f": f}


def make_geometry(n, l):
    """Shape-only staging (lane masks + pooling matrix), computed once per (N, L)."""
    l0 = (l - 7) // 2 + 1          # stem output length (k=7, stride=2, pad=0)
    nl = n * l0
    lane_mult = 128 if nl <= 128 else 256   # fill the 256-wide v6e/v7x MXU when big enough
    padl = _rup(nl, lane_mult)
    padn = _rup(n, 128)                     # lane-dense output slab width
    pos = jnp.arange(padl)
    t = pos % l0
    samp = pos // l0
    valid = pos < nl
    masks = jnp.stack([valid, valid & (t > 0), valid & (t < l0 - 1)],
                      axis=0).astype(jnp.float32)                       # (3, PADL)
    pool = ((valid[:, None] & (samp[:, None] == jnp.arange(padn)[None, :]))
            .astype(jnp.float32) / l0)                                  # (PADL, PADN)
    return {"masks": masks, "pool": pool, "l0": l0, "nl": nl,
            "padl": padl, "padn": padn}


# ---------------------------------------------------------------------------
# Forward (jittable): only the stem im2col patch stack is per-call staging.
# ---------------------------------------------------------------------------
def densenet_forward(w_slab, fslab, masks, pool, x_ncl):
    """x_ncl: (N, 1, L).  Returns (logits (N, classes), pooled (N, C_final)) matching the
    PyTorch module's (out, out1)."""
    plan = PLAN
    n, c_in, l = x_ncl.shape
    if c_in != 1:
        raise ValueError("DenseNet stem expects a single input channel")
    l0 = (l - 7) // 2 + 1
    nl = n * l0
    padl = masks.shape[1]
    # stem im2col patches (k=7, stride=2): p1[j, n*L0 + t] = x[n, 0, 2t + j]
    x2 = x_ncl[:, 0, :].astype(jnp.float32)
    taps = [x2[:, j:j + 2 * l0:2] for j in range(7)]
    p1 = jnp.stack(taps, axis=0).reshape(7, nl)
    p1 = jnp.pad(p1, ((0, 0), (0, padl - nl))).astype(w_slab.dtype)

    kernel = functools.partial(_densenet_kernel, plan=plan, padl=padl,
                               inv_count=1.0 / nl, mxu_dtype=w_slab.dtype)
    out_slab = pl.pallas_call(
        kernel,
        out_shape=jax.ShapeDtypeStruct((plan["out_rows"], pool.shape[1]), jnp.float32),
        in_specs=[_full_spec(a) for a in (masks, pool, p1, w_slab, fslab)],
        out_specs=pl.BlockSpec((plan["out_rows"], pool.shape[1]), lambda: (0, 0)),
    )(masks, pool, p1, w_slab, fslab)

    cfr = plan["c_final_real"]
    pooled = out_slab[0:cfr, 0:n].T                         # (N, C_final)
    logits = out_slab[cfr:cfr + NUM_CLASSES, 0:n].T         # (N, num_classes)
    return logits, pooled


# ---------------------------------------------------------------------------
# Parameters (deterministic, shapes from DenseNet.__init__)
# ---------------------------------------------------------------------------
def init_params(key):
    params = {}
    keys = iter(jax.random.split(key, 64))

    def conv_w(cout, cin, k):
        fan_in = cin * k
        return jax.random.normal(next(keys), (cout, cin, k), jnp.float32) / math.sqrt(fan_in)

    num_planes = 2 * GROWTH
    params["conv1_w"] = conv_w(num_planes, 1, 7)

    for s in range(3):
        blocks = []
        inp = num_planes
        for _ in range(NBLOCKS[s]):
            blocks.append({
                "w": conv_w(GROWTH, inp, 3),
                "gamma": jnp.ones((GROWTH,), jnp.float32),
                "beta": jnp.zeros((GROWTH,), jnp.float32),
            })
            inp = GROWTH
        params[f"dense{s + 1}"] = blocks
        num_planes += NBLOCKS[s] * GROWTH
        out_planes = int(math.floor(num_planes * REDUCTION))
        params[f"trans{s + 1}"] = {
            "w": conv_w(out_planes, num_planes, 1),
            "gamma": jnp.ones((out_planes,), jnp.float32),
            "beta": jnp.zeros((out_planes,), jnp.float32),
        }
        num_planes = out_planes

    params["bn_gamma"] = jnp.ones((num_planes,), jnp.float32)
    params["bn_beta"] = jnp.zeros((num_planes,), jnp.float32)
    params["lin_w"] = jax.random.normal(next(keys), (NUM_CLASSES, num_planes),
                                        jnp.float32) / math.sqrt(num_planes)
    params["lin_b"] = jnp.zeros((NUM_CLASSES,), jnp.float32)
    return params


if __name__ == "__main__":
    key = jax.random.PRNGKey(0)
    k_data, k_param = jax.random.split(key)
    x = jax.random.normal(k_data, (2, 1, 128), jnp.float32)    # (N, C=1, L) like PyTorch
    params = init_params(k_param)

    packed = pack_params(params)      # one-time parameter staging (hoisted per review)
    geo = make_geometry(2, 128)       # one-time shape staging (masks + pool matrix)

    fwd = jax.jit(densenet_forward)
    out, out1 = fwd(packed["w"], packed["f"], geo["masks"], geo["pool"], x)
    jax.block_until_ready((out, out1))
    assert out.shape == (2, NUM_CLASSES)
    assert out1.shape == (2, PLAN["c_final_real"])
    assert bool(jnp.all(jnp.isfinite(out))) and bool(jnp.all(jnp.isfinite(out1)))
    print("KERNEL_OK")
</pallas_src>

<mosaic_0001>
module attributes {stable_mosaic.version = 11 : i64} {
  func.func @_densenet_kernel(%arg0: memref<3x128xf32, #tpu.memory_space<vmem>>, %arg1: memref<128x128xf32, #tpu.memory_space<vmem>>, %arg2: memref<7x128xbf16, #tpu.memory_space<vmem>>, %arg3: memref<48x1280xbf16, #tpu.memory_space<vmem>>, %arg4: memref<32x53xf32, #tpu.memory_space<vmem>>, %arg5: memref<32x128xf32, #tpu.memory_space<vmem>>) attributes {dimension_semantics = [], scalar_prefetch = 0 : i64, scratch_operands = 0 : i64, tpu.core_type = #tpu.core_type<tc>} {
    %c0 = arith.constant 0 : index
    %c0_0 = arith.constant 0 : index
    %0 = vector.load %arg0[%c0, %c0_0] : memref<3x128xf32, #tpu.memory_space<vmem>>, vector<1x128xf32>
    %c1 = arith.constant 1 : index
    %c0_1 = arith.constant 0 : index
    %1 = vector.load %arg0[%c1, %c0_1] : memref<3x128xf32, #tpu.memory_space<vmem>>, vector<1x128xf32>
    %c2 = arith.constant 2 : index
    %c0_2 = arith.constant 0 : index
    %2 = vector.load %arg0[%c2, %c0_2] : memref<3x128xf32, #tpu.memory_space<vmem>>, vector<1x128xf32>
    %c0_3 = arith.constant 0 : index
    %c0_4 = arith.constant 0 : index
    %3 = vector.load %arg3[%c0_3, %c0_4] : memref<48x1280xbf16, #tpu.memory_space<vmem>>, vector<32x7xbf16>
    %c0_5 = arith.constant 0 : index
    %c0_6 = arith.constant 0 : index
    %4 = vector.load %arg2[%c0_5, %c0_6] : memref<7x128xbf16, #tpu.memory_space<vmem>>, vector<7x128xbf16>
    %cst = arith.constant dense<0.000000e+00> : vector<32x128xf32>
    %5 = tpu.matmul %3, %4, %cst {dimension_numbers = #tpu.dot_dimension_numbers<[1], [0], [0], [1], [0, 0, 1, 1], [], []>} : vector<32x7xbf16>, vector<7x128xbf16>, vector<32x128xf32> -> vector<32x128xf32>
    %6 = arith.truncf %5 : vector<32x128xf32> to vector<32x128xbf16>
    %c0_7 = arith.constant 0 : index
    %c128 = arith.constant 128 : index
    %7 = vector.load %arg3[%c0_7, %c128] : memref<48x1280xbf16, #tpu.memory_space<vmem>>, vector<48x32xbf16>
    %cst_8 = arith.constant dense<0.000000e+00> : vector<48x128xf32>
    %8 = tpu.matmul %7, %6, %cst_8 {dimension_numbers = #tpu.dot_dimension_numbers<[1], [0], [0], [1], [0, 0, 1, 1], [], []>} : vector<48x32xbf16>, vector<32x128xbf16>, vector<48x128xf32> -> vector<48x128xf32>
    %9 = vector.extract_strided_slice %8 {offsets = [0, 0], sizes = [16, 128], strides = [1, 1]} : vector<48x128xf32> to vector<16x128xf32>
    %c1_i32 = arith.constant 1 : i32
    %10 = tpu.dynamic_rotate %9 by %c1_i32 dim 1 : vector<16x128xf32>, i32 -> vector<16x128xf32>
    %11 = vector.broadcast %1 : vector<1x128xf32> to vector<16x128xf32>
    %12 = arith.mulf %10, %11 : vector<16x128xf32>
    %13 = vector.extract_strided_slice %8 {offsets = [16, 0], sizes = [16, 128], strides = [1, 1]} : vector<48x128xf32> to vector<16x128xf32>
    %14 = vector.extract_strided_slice %8 {offsets = [32, 0], sizes = [16, 128], strides = [1, 1]} : vector<48x128xf32> to vector<16x128xf32>
    %c127_i32 = arith.constant 127 : i32
    %15 = tpu.dynamic_rotate %14 by %c127_i32 dim 1 : vector<16x128xf32>, i32 -> vector<16x128xf32>
    %16 = vector.broadcast %2 : vector<1x128xf32> to vector<16x128xf32>
    %17 = arith.mulf %15, %16 : vector<16x128xf32>
    %18 = arith.addf %12, %13 : vector<16x128xf32>
    %19 = arith.addf %18, %17 : vector<16x128xf32>
    %cst_9 = arith.constant dense<0.000000e+00> : vector<16xf32>
    %20 = vector.multi_reduction <add>, %19, %cst_9 [1] : vector<16x128xf32> to vector<16xf32>
    %21 = vector.shape_cast %20 : vector<16xf32> to vector<16x1xf32>
    %22 = arith.mulf %19, %19 : vector<16x128xf32>
    %cst_10 = arith.constant dense<0.000000e+00> : vector<16xf32>
    %23 = vector.multi_reduction <add>, %22, %cst_10 [1] : vector<16x128xf32> to vector<16xf32>
    %24 = vector.shape_cast %23 : vector<16xf32> to vector<16x1xf32>
    %cst_11 = arith.constant 0.00819672085 : f32
    %25 = vector.broadcast %cst_11 : f32 to vector<16x1xf32>
    %26 = arith.mulf %21, %25 : vector<16x1xf32>
    %cst_12 = arith.constant 0.00819672085 : f32
    %27 = vector.broadcast %cst_12 : f32 to vector<16x1xf32>
    %28 = arith.mulf %24, %27 : vector<16x1xf32>
    %29 = arith.mulf %26, %26 : vector<16x1xf32>
    %30 = arith.subf %28, %29 : vector<16x1xf32>
    %cst_13 = arith.constant 0.000000e+00 : f32
    %31 = vector.broadcast %cst_13 : f32 to vector<16x1xf32>
    %32 = arith.maximumf %30, %31 : vector<16x1xf32>
    %c0_14 = arith.constant 0 : index
    %c33 = arith.constant 33 : index
    %33 = vector.load %arg4[%c0_14, %c33] : memref<32x53xf32, #tpu.memory_space<vmem>>, vector<16x1xf32>
    %c0_15 = arith.constant 0 : index
    %c34 = arith.constant 34 : index
    %34 = vector.load %arg4[%c0_15, %c34] : memref<32x53xf32, #tpu.memory_space<vmem>>, vector<16x1xf32>
    %35 = vector.broadcast %26 : vector<16x1xf32> to vector<16x128xf32>
    %36 = arith.subf %19, %35 : vector<16x128xf32>
    %cst_16 = arith.constant 9.99999974E-6 : f32
    %37 = vector.broadcast %cst_16 : f32 to vector<16x1xf32>
    %38 = arith.addf %32, %37 : vector<16x1xf32>
    %39 = math.rsqrt %38 : vector<16x1xf32>
    %40 = vector.broadcast %39 : vector<16x1xf32> to vector<16x128xf32>
    %41 = arith.mulf %36, %40 : vector<16x128xf32>
    %42 = vector.broadcast %33 : vector<16x1xf32> to vector<16x128xf32>
    %43 = arith.mulf %41, %42 : vector<16x128xf32>
    %44 = vector.broadcast %34 : vector<16x1xf32> to vector<16x128xf32>
    %45 = arith.addf %43, %44 : vector<16x128xf32>
    %cst_17 = arith.constant 0.000000e+00 : f32
    %46 = vector.broadcast %cst_17 : f32 to vector<16x128xf32>
    %47 = arith.maximumf %45, %46 : vector<16x128xf32>
    %48 = vector.broadcast %0 : vector<1x128xf32> to vector<16x128xf32>
    %49 = arith.mulf %47, %48 : vector<16x128xf32>
    %50 = arith.truncf %49 : vector<16x128xf32> to vector<16x128xbf16>
    %c0_18 = arith.constant 0 : index
    %c256 = arith.constant 256 : index
    %51 = vector.load %arg3[%c0_18, %c256] : memref<48x1280xbf16, #tpu.memory_space<vmem>>, vector<48x16xbf16>
    %cst_19 = arith.constant dense<0.000000e+00> : vector<48x128xf32>
    %52 = tpu.matmul %51, %50, %cst_19 {dimension_numbers = #tpu.dot_dimension_numbers<[1], [0], [0], [1], [0, 0, 1, 1], [], []>} : vector<48x16xbf16>, vector<16x128xbf16>, vector<48x128xf32> -> vector<48x128xf32>
    %53 = vector.extract_strided_slice %52 {offsets = [0, 0], sizes = [16, 128], strides = [1, 1]} : vector<48x128xf32> to vector<16x128xf32>
    %c1_i32_20 = arith.constant 1 : i32
    %54 = tpu.dynamic_rotate %53 by %c1_i32_20 dim 1 : vector<16x128xf32>, i32 -> vector<16x128xf32>
    %55 = vector.broadcast %1 : vector<1x128xf32> to vector<16x128xf32>
    %56 = arith.mulf %54, %55 : vector<16x128xf32>
    %57 = vector.extract_strided_slice %52 {offsets = [16, 0], sizes = [16, 128], strides = [1, 1]} : vector<48x128xf32> to vector<16x128xf32>
    %58 = vector.extract_strided_slice %52 {offsets = [32, 0], sizes = [16, 128], strides = [1, 1]} : vector<48x128xf32> to vector<16x128xf32>
    %c127_i32_21 = arith.constant 127 : i32
    %59 = tpu.dynamic_rotate %58 by %c127_i32_21 dim 1 : vector<16x128xf32>, i32 -> vector<16x128xf32>
    %60 = vector.broadcast %2 : vector<1x128xf32> to vector<16x128xf32>
    %61 = arith.mulf %59, %60 : vector<16x128xf32>
    %62 = arith.addf %56, %57 : vector<16x128xf32>
    %63 = arith.addf %62, %61 : vector<16x128xf32>
    %cst_22 = arith.constant dense<0.000000e+00> : vector<16xf32>
    %64 = vector.multi_reduction <add>, %63, %cst_22 [1] : vector<16x128xf32> to vector<16xf32>
    %65 = vector.shape_cast %64 : vector<16xf32> to vector<16x1xf32>
    %66 = arith.mulf %63, %63 : vector<16x128xf32>
    %cst_23 = arith.constant dense<0.000000e+00> : vector<16xf32>
    %67 = vector.multi_reduction <add>, %66, %cst_23 [1] : vector<16x128xf32> to vector<16xf32>
    %68 = vector.shape_cast %67 : vector<16xf32> to vector<16x1xf32>
    %cst_24 = arith.constant 0.00819672085 : f32
    %69 = vector.broadcast %cst_24 : f32 to vector<16x1xf32>
    %70 = arith.mulf %65, %69 : vector<16x1xf32>
    %cst_25 = arith.constant 0.00819672085 : f32
    %71 = vector.broadcast %cst_25 : f32 to vector<16x1xf32>
    %72 = arith.mulf %68, %71 : vector<16x1xf32>
    %73 = arith.mulf %70, %70 : vector<16x1xf32>
    %74 = arith.subf %72, %73 : vector<16x1xf32>
    %cst_26 = arith.constant 0.000000e+00 : f32
    %75 = vector.broadcast %cst_26 : f32 to vector<16x1xf32>
    %76 = arith.maximumf %74, %75 : vector<16x1xf32>
    %c0_27 = arith.constant 0 : index
    %c35 = arith.constant 35 : index
    %77 = vector.load %arg4[%c0_27, %c35] : memref<32x53xf32, #tpu.memory_space<vmem>>, vector<16x1xf32>
    %c0_28 = arith.constant 0 : index
    %c36 = arith.constant 36 : index
    %78 = vector.load %arg4[%c0_28, %c36] : memref<32x53xf32, #tpu.memory_space<vmem>>, vector<16x1xf32>
    %79 = vector.broadcast %70 : vector<16x1xf32> to vector<16x128xf32>
    %80 = arith.subf %63, %79 : vector<16x128xf32>
    %cst_29 = arith.constant 9.99999974E-6 : f32
    %81 = vector.broadcast %cst_29 : f32 to vector<16x1xf32>
    %82 = arith.addf %76, %81 : vector<16x1xf32>
    %83 = math.rsqrt %82 : vector<16x1xf32>
    %84 = vector.broadcast %83 : vector<16x1xf32> to vector<16x128xf32>
    %85 = arith.mulf %80, %84 : vector<16x128xf32>
    %86 = vector.broadcast %77 : vector<16x1xf32> to vector<16x128xf32>
    %87 = arith.mulf %85, %86 : vector<16x128xf32>
    %88 = vector.broadcast %78 : vector<16x1xf32> to vector<16x128xf32>
    %89 = arith.addf %87, %88 : vector<16x128xf32>
    %cst_30 = arith.constant 0.000000e+00 : f32
    %90 = vector.broadcast %cst_30 : f32 to vector<16x128xf32>
    %91 = arith.maximumf %89, %90 : vector<16x128xf32>
    %92 = vector.broadcast %0 : vector<1x128xf32> to vector<16x128xf32>
    %93 = arith.mulf %91, %92 : vector<16x128xf32>
    %94 = arith.truncf %93 : vector<16x128xf32> to vector<16x128xbf16>
    %95 = tpu.concatenate %6, %50, %94 in 0 : vector<32x128xbf16>, vector<16x128xbf16>, vector<16x128xbf16> -> vector<64x128xbf16>
    %c0_31 = arith.constant 0 : index
    %c384 = arith.constant 384 : index
    %96 = vector.load %arg3[%c0_31, %c384] : memref<48x1280xbf16, #tpu.memory_space<vmem>>, vector<32x64xbf16>
    %cst_32 = arith.constant dense<0.000000e+00> : vector<32x128xf32>
    %97 = tpu.matmul %96, %95, %cst_32 {dimension_numbers = #tpu.dot_dimension_numbers<[1], [0], [0], [1], [0, 0, 1, 1], [], []>} : vector<32x64xbf16>, vector<64x128xbf16>, vector<32x128xf32> -> vector<32x128xf32>
    %cst_33 = arith.constant dense<0.000000e+00> : vector<32xf32>
    %98 = vector.multi_reduction <add>, %97, %cst_33 [1] : vector<32x128xf32> to vector<32xf32>
    %99 = vector.shape_cast %98 : vector<32xf32> to vector<32x1xf32>
    %100 = arith.mulf %97, %97 : vector<32x128xf32>
    %cst_34 = arith.constant dense<0.000000e+00> : vector<32xf32>
    %101 = vector.multi_reduction <add>, %100, %cst_34 [1] : vector<32x128xf32> to vector<32xf32>
    %102 = vector.shape_cast %101 : vector<32xf32> to vector<32x1xf32>
    %cst_35 = arith.constant 0.00819672085 : f32
    %103 = vector.broadcast %cst_35 : f32 to vector<32x1xf32>
    %104 = arith.mulf %99, %103 : vector<32x1xf32>
    %cst_36 = arith.constant 0.00819672085 : f32
    %105 = vector.broadcast %cst_36 : f32 to vector<32x1xf32>
    %106 = arith.mulf %102, %105 : vector<32x1xf32>
    %107 = arith.mulf %104, %104 : vector<32x1xf32>
    %108 = arith.subf %106, %107 : vector<32x1xf32>
    %cst_37 = arith.constant 0.000000e+00 : f32
    %109 = vector.broadcast %cst_37 : f32 to vector<32x1xf32>
    %110 = arith.maximumf %108, %109 : vector<32x1xf32>
    %c0_38 = arith.constant 0 : index
    %c37 = arith.constant 37 : index
    %111 = vector.load %arg4[%c0_38, %c37] : memref<32x53xf32, #tpu.memory_space<vmem>>, vector<32x1xf32>
    %c0_39 = arith.constant 0 : index
    %c38 = arith.constant 38 : index
    %112 = vector.load %arg4[%c0_39, %c38] : memref<32x53xf32, #tpu.memory_space<vmem>>, vector<32x1xf32>
    %113 = vector.broadcast %104 : vector<32x1xf32> to vector<32x128xf32>
    %114 = arith.subf %97, %113 : vector<32x128xf32>
    %cst_40 = arith.constant 9.99999974E-6 : f32
    %115 = vector.broadcast %cst_40 : f32 to vector<32x1xf32>
    %116 = arith.addf %110, %115 : vector<32x1xf32>
    %117 = math.rsqrt %116 : vector<32x1xf32>
    %118 = vector.broadcast %117 : vector<32x1xf32> to vector<32x128xf32>
    %119 = arith.mulf %114, %118 : vector<32x128xf32>
    %120 = vector.broadcast %111 : vector<32x1xf32> to vector<32x128xf32>
    %121 = arith.mulf %119, %120 : vector<32x128xf32>
    %122 = vector.broadcast %112 : vector<32x1xf32> to vector<32x128xf32>
    %123 = arith.addf %121, %122 : vector<32x128xf32>
    %cst_41 = arith.constant 0.000000e+00 : f32
    %124 = vector.broadcast %cst_41 : f32 to vector<32x128xf32>
    %125 = arith.maximumf %123, %124 : vector<32x128xf32>
    %126 = vector.broadcast %0 : vector<1x128xf32> to vector<32x128xf32>
    %127 = arith.mulf %125, %126 : vector<32x128xf32>
    %128 = arith.truncf %127 : vector<32x128xf32> to vector<32x128xbf16>
    %c0_42 = arith.constant 0 : index
    %c512 = arith.constant 512 : index
    %129 = vector.load %arg3[%c0_42, %c512] : memref<48x1280xbf16, #tpu.memory_space<vmem>>, vector<48x32xbf16>
    %cst_43 = arith.constant dense<0.000000e+00> : vector<48x128xf32>
    %130 = tpu.matmul %129, %128, %cst_43 {dimension_numbers = #tpu.dot_dimension_numbers<[1], [0], [0], [1], [0, 0, 1, 1], [], []>} : vector<48x32xbf16>, vector<32x128xbf16>, vector<48x128xf32> -> vector<48x128xf32>
    %131 = vector.extract_strided_slice %130 {offsets = [0, 0], sizes = [16, 128], strides = [1, 1]} : vector<48x128xf32> to vector<16x128xf32>
    %c1_i32_44 = arith.constant 1 : i32
    %132 = tpu.dynamic_rotate %131 by %c1_i32_44 dim 1 : vector<16x128xf32>, i32 -> vector<16x128xf32>
    %133 = vector.broadcast %1 : vector<1x128xf32> to vector<16x128xf32>
    %134 = arith.mulf %132, %133 : vector<16x128xf32>
    %135 = vector.extract_strided_slice %130 {offsets = [16, 0], sizes = [16, 128], strides = [1, 1]} : vector<48x128xf32> to vector<16x128xf32>
    %136 = vector.extract_strided_slice %130 {offsets = [32, 0], sizes = [16, 128], strides = [1, 1]} : vector<48x128xf32> to vector<16x128xf32>
    %c127_i32_45 = arith.constant 127 : i32
    %137 = tpu.dynamic_rotate %136 by %c127_i32_45 dim 1 : vector<16x128xf32>, i32 -> vector<16x128xf32>
    %138 = vector.broadcast %2 : vector<1x128xf32> to vector<16x128xf32>
    %139 = arith.mulf %137, %138 : vector<16x128xf32>
    %140 = arith.addf %134, %135 : vector<16x128xf32>
    %141 = arith.addf %140, %139 : vector<16x128xf32>
    %cst_46 = arith.constant dense<0.000000e+00> : vector<16xf32>
    %142 = vector.multi_reduction <add>, %141, %cst_46 [1] : vector<16x128xf32> to vector<16xf32>
    %143 = vector.shape_cast %142 : vector<16xf32> to vector<16x1xf32>
    %144 = arith.mulf %141, %141 : vector<16x128xf32>
    %cst_47 = arith.constant dense<0.000000e+00> : vector<16xf32>
    %145 = vector.multi_reduction <add>, %144, %cst_47 [1] : vector<16x128xf32> to vector<16xf32>
    %146 = vector.shape_cast %145 : vector<16xf32> to vector<16x1xf32>
    %cst_48 = arith.constant 0.00819672085 : f32
    %147 = vector.broadcast %cst_48 : f32 to vector<16x1xf32>
    %148 = arith.mulf %143, %147 : vector<16x1xf32>
    %cst_49 = arith.constant 0.00819672085 : f32
    %149 = vector.broadcast %cst_49 : f32 to vector<16x1xf32>
    %150 = arith.mulf %146, %149 : vector<16x1xf32>
    %151 = arith.mulf %148, %148 : vector<16x1xf32>
    %152 = arith.subf %150, %151 : vector<16x1xf32>
    %cst_50 = arith.constant 0.000000e+00 : f32
    %153 = vector.broadcast %cst_50 : f32 to vector<16x1xf32>
    %154 = arith.maximumf %152, %153 : vector<16x1xf32>
    %c0_51 = arith.constant 0 : index
    %c39 = arith.constant 39 : index
    %155 = vector.load %arg4[%c0_51, %c39] : memref<32x53xf32, #tpu.memory_space<vmem>>, vector<16x1xf32>
    %c0_52 = arith.constant 0 : index
    %c40 = arith.constant 40 : index
    %156 = vector.load %arg4[%c0_52, %c40] : memref<32x53xf32, #tpu.memory_space<vmem>>, vector<16x1xf32>
    %157 = vector.broadcast %148 : vector<16x1xf32> to vector<16x128xf32>
    %158 = arith.subf %141, %157 : vector<16x128xf32>
    %cst_53 = arith.constant 9.99999974E-6 : f32
    %159 = vector.broadcast %cst_53 : f32 to vector<16x1xf32>
    %160 = arith.addf %154, %159 : vector<16x1xf32>
    %161 = math.rsqrt %160 : vector<16x1xf32>
    %162 = vector.broadcast %161 : vector<16x1xf32> to vector<16x128xf32>
    %163 = arith.mulf %158, %162 : vector<16x128xf32>
    %164 = vector.broadcast %155 : vector<16x1xf32> to vector<16x128xf32>
    %165 = arith.mulf %163, %164 : vector<16x128xf32>
    %166 = vector.broadcast %156 : vector<16x1xf32> to vector<16x128xf32>
    %167 = arith.addf %165, %166 : vector<16x128xf32>
    %cst_54 = arith.constant 0.000000e+00 : f32
    %168 = vector.broadcast %cst_54 : f32 to vector<16x128xf32>
    %169 = arith.maximumf %167, %168 : vector<16x128xf32>
    %170 = vector.broadcast %0 : vector<1x128xf32> to vector<16x128xf32>
    %171 = arith.mulf %169, %170 : vector<16x128xf32>
    %172 = arith.truncf %171 : vector<16x128xf32> to vector<16x128xbf16>
    %c0_55 = arith.constant 0 : index
    %c640 = arith.constant 640 : index
    %173 = vector.load %arg3[%c0_55, %c640] : memref<48x1280xbf16, #tpu.memory_space<vmem>>, vector<48x16xbf16>
    %cst_56 = arith.constant dense<0.000000e+00> : vector<48x128xf32>
    %174 = tpu.matmul %173, %172, %cst_56 {dimension_numbers = #tpu.dot_dimension_numbers<[1], [0], [0], [1], [0, 0, 1, 1], [], []>} : vector<48x16xbf16>, vector<16x128xbf16>, vector<48x128xf32> -> vector<48x128xf32>
    %175 = vector.extract_strided_slice %174 {offsets = [0, 0], sizes = [16, 128], strides = [1, 1]} : vector<48x128xf32> to vector<16x128xf32>
    %c1_i32_57 = arith.constant 1 : i32
    %176 = tpu.dynamic_rotate %175 by %c1_i32_57 dim 1 : vector<16x128xf32>, i32 -> vector<16x128xf32>
    %177 = vector.broadcast %1 : vector<1x128xf32> to vector<16x128xf32>
    %178 = arith.mulf %176, %177 : vector<16x128xf32>
    %179 = vector.extract_strided_slice %174 {offsets = [16, 0], sizes = [16, 128], strides = [1, 1]} : vector<48x128xf32> to vector<16x128xf32>
    %180 = vector.extract_strided_slice %174 {offsets = [32, 0], sizes = [16, 128], strides = [1, 1]} : vector<48x128xf32> to vector<16x128xf32>
    %c127_i32_58 = arith.constant 127 : i32
    %181 = tpu.dynamic_rotate %180 by %c127_i32_58 dim 1 : vector<16x128xf32>, i32 -> vector<16x128xf32>
    %182 = vector.broadcast %2 : vector<1x128xf32> to vector<16x128xf32>
    %183 = arith.mulf %181, %182 : vector<16x128xf32>
    %184 = arith.addf %178, %179 : vector<16x128xf32>
    %185 = arith.addf %184, %183 : vector<16x128xf32>
    %cst_59 = arith.constant dense<0.000000e+00> : vector<16xf32>
    %186 = vector.multi_reduction <add>, %185, %cst_59 [1] : vector<16x128xf32> to vector<16xf32>
    %187 = vector.shape_cast %186 : vector<16xf32> to vector<16x1xf32>
    %188 = arith.mulf %185, %185 : vector<16x128xf32>
    %cst_60 = arith.constant dense<0.000000e+00> : vector<16xf32>
    %189 = vector.multi_reduction <add>, %188, %cst_60 [1] : vector<16x128xf32> to vector<16xf32>
    %190 = vector.shape_cast %189 : vector<16xf32> to vector<16x1xf32>
    %cst_61 = arith.constant 0.00819672085 : f32
    %191 = vector.broadcast %cst_61 : f32 to vector<16x1xf32>
    %192 = arith.mulf %187, %191 : vector<16x1xf32>
    %cst_62 = arith.constant 0.00819672085 : f32
    %193 = vector.broadcast %cst_62 : f32 to vector<16x1xf32>
    %194 = arith.mulf %190, %193 : vector<16x1xf32>
    %195 = arith.mulf %192, %192 : vector<16x1xf32>
    %196 = arith.subf %194, %195 : vector<16x1xf32>
    %cst_63 = arith.constant 0.000000e+00 : f32
    %197 = vector.broadcast %cst_63 : f32 to vector<16x1xf32>
    %198 = arith.maximumf %196, %197 : vector<16x1xf32>
    %c0_64 = arith.constant 0 : index
    %c41 = arith.constant 41 : index
    %199 = vector.load %arg4[%c0_64, %c41] : memref<32x53xf32, #tpu.memory_space<vmem>>, vector<16x1xf32>
    %c0_65 = arith.constant 0 : index
    %c42 = arith.constant 42 : index
    %200 = vector.load %arg4[%c0_65, %c42] : memref<32x53xf32, #tpu.memory_space<vmem>>, vector<16x1xf32>
    %201 = vector.broadcast %192 : vector<16x1xf32> to vector<16x128xf32>
    %202 = arith.subf %185, %201 : vector<16x128xf32>
    %cst_66 = arith.constant 9.99999974E-6 : f32
    %203 = vector.broadcast %cst_66 : f32 to vector<16x1xf32>
    %204 = arith.addf %198, %203 : vector<16x1xf32>
    %205 = math.rsqrt %204 : vector<16x1xf32>
    %206 = vector.broadcast %205 : vector<16x1xf32> to vector<16x128xf32>
    %207 = arith.mulf %202, %206 : vector<16x128xf32>
    %208 = vector.broadcast %199 : vector<16x1xf32> to vector<16x128xf32>
    %209 = arith.mulf %207, %208 : vector<16x128xf32>
    %210 = vector.broadcast %200 : vector<16x1xf32> to vector<16x128xf32>
    %211 = arith.addf %209, %210 : vector<16x128xf32>
    %cst_67 = arith.constant 0.000000e+00 : f32
    %212 = vector.broadcast %cst_67 : f32 to vector<16x128xf32>
    %213 = arith.maximumf %211, %212 : vector<16x128xf32>
    %214 = vector.broadcast %0 : vector<1x128xf32> to vector<16x128xf32>
    %215 = arith.mulf %213, %214 : vector<16x128xf32>
    %216 = arith.truncf %215 : vector<16x128xf32> to vector<16x128xbf16>
    %217 = tpu.concatenate %128, %172, %216 in 0 : vector<32x128xbf16>, vector<16x128xbf16>, vector<16x128xbf16> -> vector<64x128xbf16>
    %c0_68 = arith.constant 0 : index
    %c768 = arith.constant 768 : index
    %218 = vector.load %arg3[%c0_68, %c768] : memref<48x1280xbf16, #tpu.memory_space<vmem>>, vector<32x64xbf16>
    %cst_69 = arith.constant dense<0.000000e+00> : vector<32x128xf32>
    %219 = tpu.matmul %218, %217, %cst_69 {dimension_numbers = #tpu.dot_dimension_numbers<[1], [0], [0], [1], [0, 0, 1, 1], [], []>} : vector<32x64xbf16>, vector<64x128xbf16>, vector<32x128xf32> -> vector<32x128xf32>
    %cst_70 = arith.constant dense<0.000000e+00> : vector<32xf32>
    %220 = vector.multi_reduction <add>, %219, %cst_70 [1] : vector<32x128xf32> to vector<32xf32>
    %221 = vector.shape_cast %220 : vector<32xf32> to vector<32x1xf32>
    %222 = arith.mulf %219, %219 : vector<32x128xf32>
    %cst_71 = arith.constant dense<0.000000e+00> : vector<32xf32>
    %223 = vector.multi_reduction <add>, %222, %cst_71 [1] : vector<32x128xf32> to vector<32xf32>
    %224 = vector.shape_cast %223 : vector<32xf32> to vector<32x1xf32>
    %cst_72 = arith.constant 0.00819672085 : f32
    %225 = vector.broadcast %cst_72 : f32 to vector<32x1xf32>
    %226 = arith.mulf %221, %225 : vector<32x1xf32>
    %cst_73 = arith.constant 0.00819672085 : f32
    %227 = vector.broadcast %cst_73 : f32 to vector<32x1xf32>
    %228 = arith.mulf %224, %227 : vector<32x1xf32>
    %229 = arith.mulf %226, %226 : vector<32x1xf32>
    %230 = arith.subf %228, %229 : vector<32x1xf32>
    %cst_74 = arith.constant 0.000000e+00 : f32
    %231 = vector.broadcast %cst_74 : f32 to vector<32x1xf32>
    %232 = arith.maximumf %230, %231 : vector<32x1xf32>
    %c0_75 = arith.constant 0 : index
    %c43 = arith.constant 43 : index
    %233 = vector.load %arg4[%c0_75, %c43] : memref<32x53xf32, #tpu.memory_space<vmem>>, vector<32x1xf32>
    %c0_76 = arith.constant 0 : index
    %c44 = arith.constant 44 : index
    %234 = vector.load %arg4[%c0_76, %c44] : memref<32x53xf32, #tpu.memory_space<vmem>>, vector<32x1xf32>
    %235 = vector.broadcast %226 : vector<32x1xf32> to vector<32x128xf32>
    %236 = arith.subf %219, %235 : vector<32x128xf32>
    %cst_77 = arith.constant 9.99999974E-6 : f32
    %237 = vector.broadcast %cst_77 : f32 to vector<32x1xf32>
    %238 = arith.addf %232, %237 : vector<32x1xf32>
    %239 = math.rsqrt %238 : vector<32x1xf32>
    %240 = vector.broadcast %239 : vector<32x1xf32> to vector<32x128xf32>
    %241 = arith.mulf %236, %240 : vector<32x128xf32>
    %242 = vector.broadcast %233 : vector<32x1xf32> to vector<32x128xf32>
    %243 = arith.mulf %241, %242 : vector<32x128xf32>
    %244 = vector.broadcast %234 : vector<32x1xf32> to vector<32x128xf32>
    %245 = arith.addf %243, %244 : vector<32x128xf32>
    %cst_78 = arith.constant 0.000000e+00 : f32
    %246 = vector.broadcast %cst_78 : f32 to vector<32x128xf32>
    %247 = arith.maximumf %245, %246 : vector<32x128xf32>
    %248 = vector.broadcast %0 : vector<1x128xf32> to vector<32x128xf32>
    %249 = arith.mulf %247, %248 : vector<32x128xf32>
    %250 = arith.truncf %249 : vector<32x128xf32> to vector<32x128xbf16>
    %c0_79 = arith.constant 0 : index
    %c896 = arith.constant 896 : index
    %251 = vector.load %arg3[%c0_79, %c896] : memref<48x1280xbf16, #tpu.memory_space<vmem>>, vector<48x32xbf16>
    %cst_80 = arith.constant dense<0.000000e+00> : vector<48x128xf32>
    %252 = tpu.matmul %251, %250, %cst_80 {dimension_numbers = #tpu.dot_dimension_numbers<[1], [0], [0], [1], [0, 0, 1, 1], [], []>} : vector<48x32xbf16>, vector<32x128xbf16>, vector<48x128xf32> -> vector<48x128xf32>
    %253 = vector.extract_strided_slice %252 {offsets = [0, 0], sizes = [16, 128], strides = [1, 1]} : vector<48x128xf32> to vector<16x128xf32>
    %c1_i32_81 = arith.constant 1 : i32
    %254 = tpu.dynamic_rotate %253 by %c1_i32_81 dim 1 : vector<16x128xf32>, i32 -> vector<16x128xf32>
    %255 = vector.broadcast %1 : vector<1x128xf32> to vector<16x128xf32>
    %256 = arith.mulf %254, %255 : vector<16x128xf32>
    %257 = vector.extract_strided_slice %252 {offsets = [16, 0], sizes = [16, 128], strides = [1, 1]} : vector<48x128xf32> to vector<16x128xf32>
    %258 = vector.extract_strided_slice %252 {offsets = [32, 0], sizes = [16, 128], strides = [1, 1]} : vector<48x128xf32> to vector<16x128xf32>
    %c127_i32_82 = arith.constant 127 : i32
    %259 = tpu.dynamic_rotate %258 by %c127_i32_82 dim 1 : vector<16x128xf32>, i32 -> vector<16x128xf32>
    %260 = vector.broadcast %2 : vector<1x128xf32> to vector<16x128xf32>
    %261 = arith.mulf %259, %260 : vector<16x128xf32>
    %262 = arith.addf %256, %257 : vector<16x128xf32>
    %263 = arith.addf %262, %261 : vector<16x128xf32>
    %cst_83 = arith.constant dense<0.000000e+00> : vector<16xf32>
    %264 = vector.multi_reduction <add>, %263, %cst_83 [1] : vector<16x128xf32> to vector<16xf32>
    %265 = vector.shape_cast %264 : vector<16xf32> to vector<16x1xf32>
    %266 = arith.mulf %263, %263 : vector<16x128xf32>
    %cst_84 = arith.constant dense<0.000000e+00> : vector<16xf32>
    %267 = vector.multi_reduction <add>, %266, %cst_84 [1] : vector<16x128xf32> to vector<16xf32>
    %268 = vector.shape_cast %267 : vector<16xf32> to vector<16x1xf32>
    %cst_85 = arith.constant 0.00819672085 : f32
    %269 = vector.broadcast %cst_85 : f32 to vector<16x1xf32>
    %270 = arith.mulf %265, %269 : vector<16x1xf32>
    %cst_86 = arith.constant 0.00819672085 : f32
    %271 = vector.broadcast %cst_86 : f32 to vector<16x1xf32>
    %272 = arith.mulf %268, %271 : vector<16x1xf32>
    %273 = arith.mulf %270, %270 : vector<16x1xf32>
    %274 = arith.subf %272, %273 : vector<16x1xf32>
    %cst_87 = arith.constant 0.000000e+00 : f32
    %275 = vector.broadcast %cst_87 : f32 to vector<16x1xf32>
    %276 = arith.maximumf %274, %275 : vector<16x1xf32>
    %c0_88 = arith.constant 0 : index
    %c45 = arith.constant 45 : index
    %277 = vector.load %arg4[%c0_88, %c45] : memref<32x53xf32, #tpu.memory_space<vmem>>, vector<16x1xf32>
    %c0_89 = arith.constant 0 : index
    %c46 = arith.constant 46 : index
    %278 = vector.load %arg4[%c0_89, %c46] : memref<32x53xf32, #tpu.memory_space<vmem>>, vector<16x1xf32>
    %279 = vector.broadcast %270 : vector<16x1xf32> to vector<16x128xf32>
    %280 = arith.subf %263, %279 : vector<16x128xf32>
    %cst_90 = arith.constant 9.99999974E-6 : f32
    %281 = vector.broadcast %cst_90 : f32 to vector<16x1xf32>
    %282 = arith.addf %276, %281 : vector<16x1xf32>
    %283 = math.rsqrt %282 : vector<16x1xf32>
    %284 = vector.broadcast %283 : vector<16x1xf32> to vector<16x128xf32>
    %285 = arith.mulf %280, %284 : vector<16x128xf32>
    %286 = vector.broadcast %277 : vector<16x1xf32> to vector<16x128xf32>
    %287 = arith.mulf %285, %286 : vector<16x128xf32>
    %288 = vector.broadcast %278 : vector<16x1xf32> to vector<16x128xf32>
    %289 = arith.addf %287, %288 : vector<16x128xf32>
    %cst_91 = arith.constant 0.000000e+00 : f32
    %290 = vector.broadcast %cst_91 : f32 to vector<16x128xf32>
    %291 = arith.maximumf %289, %290 : vector<16x128xf32>
    %292 = vector.broadcast %0 : vector<1x128xf32> to vector<16x128xf32>
    %293 = arith.mulf %291, %292 : vector<16x128xf32>
    %294 = arith.truncf %293 : vector<16x128xf32> to vector<16x128xbf16>
    %c0_92 = arith.constant 0 : index
    %c1024 = arith.constant 1024 : index
    %295 = vector.load %arg3[%c0_92, %c1024] : memref<48x1280xbf16, #tpu.memory_space<vmem>>, vector<48x16xbf16>
    %cst_93 = arith.constant dense<0.000000e+00> : vector<48x128xf32>
    %296 = tpu.matmul %295, %294, %cst_93 {dimension_numbers = #tpu.dot_dimension_numbers<[1], [0], [0], [1], [0, 0, 1, 1], [], []>} : vector<48x16xbf16>, vector<16x128xbf16>, vector<48x128xf32> -> vector<48x128xf32>
    %297 = vector.extract_strided_slice %296 {offsets = [0, 0], sizes = [16, 128], strides = [1, 1]} : vector<48x128xf32> to vector<16x128xf32>
    %c1_i32_94 = arith.constant 1 : i32
    %298 = tpu.dynamic_rotate %297 by %c1_i32_94 dim 1 : vector<16x128xf32>, i32 -> vector<16x128xf32>
    %299 = vector.broadcast %1 : vector<1x128xf32> to vector<16x128xf32>
    %300 = arith.mulf %298, %299 : vector<16x128xf32>
    %301 = vector.extract_strided_slice %296 {offsets = [16, 0], sizes = [16, 128], strides = [1, 1]} : vector<48x128xf32> to vector<16x128xf32>
    %302 = vector.extract_strided_slice %296 {offsets = [32, 0], sizes = [16, 128], strides = [1, 1]} : vector<48x128xf32> to vector<16x128xf32>
    %c127_i32_95 = arith.constant 127 : i32
    %303 = tpu.dynamic_rotate %302 by %c127_i32_95 dim 1 : vector<16x128xf32>, i32 -> vector<16x128xf32>
    %304 = vector.broadcast %2 : vector<1x128xf32> to vector<16x128xf32>
    %305 = arith.mulf %303, %304 : vector<16x128xf32>
    %306 = arith.addf %300, %301 : vector<16x128xf32>
    %307 = arith.addf %306, %305 : vector<16x128xf32>
    %cst_96 = arith.constant dense<0.000000e+00> : vector<16xf32>
    %308 = vector.multi_reduction <add>, %307, %cst_96 [1] : vector<16x128xf32> to vector<16xf32>
    %309 = vector.shape_cast %308 : vector<16xf32> to vector<16x1xf32>
    %310 = arith.mulf %307, %307 : vector<16x128xf32>
    %cst_97 = arith.constant dense<0.000000e+00> : vector<16xf32>
    %311 = vector.multi_reduction <add>, %310, %cst_97 [1] : vector<16x128xf32> to vector<16xf32>
    %312 = vector.shape_cast %311 : vector<16xf32> to vector<16x1xf32>
    %cst_98 = arith.constant 0.00819672085 : f32
    %313 = vector.broadcast %cst_98 : f32 to vector<16x1xf32>
    %314 = arith.mulf %309, %313 : vector<16x1xf32>
    %cst_99 = arith.constant 0.00819672085 : f32
    %315 = vector.broadcast %cst_99 : f32 to vector<16x1xf32>
    %316 = arith.mulf %312, %315 : vector<16x1xf32>
    %317 = arith.mulf %314, %314 : vector<16x1xf32>
    %318 = arith.subf %316, %317 : vector<16x1xf32>
    %cst_100 = arith.constant 0.000000e+00 : f32
    %319 = vector.broadcast %cst_100 : f32 to vector<16x1xf32>
    %320 = arith.maximumf %318, %319 : vector<16x1xf32>
    %c0_101 = arith.constant 0 : index
    %c47 = arith.constant 47 : index
    %321 = vector.load %arg4[%c0_101, %c47] : memref<32x53xf32, #tpu.memory_space<vmem>>, vector<16x1xf32>
    %c0_102 = arith.constant 0 : index
    %c48 = arith.constant 48 : index
    %322 = vector.load %arg4[%c0_102, %c48] : memref<32x53xf32, #tpu.memory_space<vmem>>, vector<16x1xf32>
    %323 = vector.broadcast %314 : vector<16x1xf32> to vector<16x128xf32>
    %324 = arith.subf %307, %323 : vector<16x128xf32>
    %cst_103 = arith.constant 9.99999974E-6 : f32
    %325 = vector.broadcast %cst_103 : f32 to vector<16x1xf32>
    %326 = arith.addf %320, %325 : vector<16x1xf32>
    %327 = math.rsqrt %326 : vector<16x1xf32>
    %328 = vector.broadcast %327 : vector<16x1xf32> to vector<16x128xf32>
    %329 = arith.mulf %324, %328 : vector<16x128xf32>
    %330 = vector.broadcast %321 : vector<16x1xf32> to vector<16x128xf32>
    %331 = arith.mulf %329, %330 : vector<16x128xf32>
    %332 = vector.broadcast %322 : vector<16x1xf32> to vector<16x128xf32>
    %333 = arith.addf %331, %332 : vector<16x128xf32>
    %cst_104 = arith.constant 0.000000e+00 : f32
    %334 = vector.broadcast %cst_104 : f32 to vector<16x128xf32>
    %335 = arith.maximumf %333, %334 : vector<16x128xf32>
    %336 = vector.broadcast %0 : vector<1x128xf32> to vector<16x128xf32>
    %337 = arith.mulf %335, %336 : vector<16x128xf32>
    %338 = arith.truncf %337 : vector<16x128xf32> to vector<16x128xbf16>
    %339 = tpu.concatenate %250, %294, %338 in 0 : vector<32x128xbf16>, vector<16x128xbf16>, vector<16x128xbf16> -> vector<64x128xbf16>
    %c0_105 = arith.constant 0 : index
    %c1152 = arith.constant 1152 : index
    %340 = vector.load %arg3[%c0_105, %c1152] : memref<48x1280xbf16, #tpu.memory_space<vmem>>, vector<32x64xbf16>
    %cst_106 = arith.constant dense<0.000000e+00> : vector<32x128xf32>
    %341 = tpu.matmul %340, %339, %cst_106 {dimension_numbers = #tpu.dot_dimension_numbers<[1], [0], [0], [1], [0, 0, 1, 1], [], []>} : vector<32x64xbf16>, vector<64x128xbf16>, vector<32x128xf32> -> vector<32x128xf32>
    %cst_107 = arith.constant dense<0.000000e+00> : vector<32xf32>
    %342 = vector.multi_reduction <add>, %341, %cst_107 [1] : vector<32x128xf32> to vector<32xf32>
    %343 = vector.shape_cast %342 : vector<32xf32> to vector<32x1xf32>
    %344 = arith.mulf %341, %341 : vector<32x128xf32>
    %cst_108 = arith.constant dense<0.000000e+00> : vector<32xf32>
    %345 = vector.multi_reduction <add>, %344, %cst_108 [1] : vector<32x128xf32> to vector<32xf32>
    %346 = vector.shape_cast %345 : vector<32xf32> to vector<32x1xf32>
    %cst_109 = arith.constant 0.00819672085 : f32
    %347 = vector.broadcast %cst_109 : f32 to vector<32x1xf32>
    %348 = arith.mulf %343, %347 : vector<32x1xf32>
    %cst_110 = arith.constant 0.00819672085 : f32
    %349 = vector.broadcast %cst_110 : f32 to vector<32x1xf32>
    %350 = arith.mulf %346, %349 : vector<32x1xf32>
    %351 = arith.mulf %348, %348 : vector<32x1xf32>
    %352 = arith.subf %350, %351 : vector<32x1xf32>
    %cst_111 = arith.constant 0.000000e+00 : f32
    %353 = vector.broadcast %cst_111 : f32 to vector<32x1xf32>
    %354 = arith.maximumf %352, %353 : vector<32x1xf32>
    %c0_112 = arith.constant 0 : index
    %c49 = arith.constant 49 : index
    %355 = vector.load %arg4[%c0_112, %c49] : memref<32x53xf32, #tpu.memory_space<vmem>>, vector<32x1xf32>
    %c0_113 = arith.constant 0 : index
    %c50 = arith.constant 50 : index
    %356 = vector.load %arg4[%c0_113, %c50] : memref<32x53xf32, #tpu.memory_space<vmem>>, vector<32x1xf32>
    %357 = vector.broadcast %348 : vector<32x1xf32> to vector<32x128xf32>
    %358 = arith.subf %341, %357 : vector<32x128xf32>
    %cst_114 = arith.constant 9.99999974E-6 : f32
    %359 = vector.broadcast %cst_114 : f32 to vector<32x1xf32>
    %360 = arith.addf %354, %359 : vector<32x1xf32>
    %361 = math.rsqrt %360 : vector<32x1xf32>
    %362 = vector.broadcast %361 : vector<32x1xf32> to vector<32x128xf32>
    %363 = arith.mulf %358, %362 : vector<32x128xf32>
    %364 = vector.broadcast %355 : vector<32x1xf32> to vector<32x128xf32>
    %365 = arith.mulf %363, %364 : vector<32x128xf32>
    %366 = vector.broadcast %356 : vector<32x1xf32> to vector<32x128xf32>
    %367 = arith.addf %365, %366 : vector<32x128xf32>
    %cst_115 = arith.constant 0.000000e+00 : f32
    %368 = vector.broadcast %cst_115 : f32 to vector<32x128xf32>
    %369 = arith.maximumf %367, %368 : vector<32x128xf32>
    %370 = vector.broadcast %0 : vector<1x128xf32> to vector<32x128xf32>
    %371 = arith.mulf %369, %370 : vector<32x128xf32>
    %cst_116 = arith.constant dense<0.000000e+00> : vector<32xf32>
    %372 = vector.multi_reduction <add>, %371, %cst_116 [1] : vector<32x128xf32> to vector<32xf32>
    %373 = vector.shape_cast %372 : vector<32xf32> to vector<32x1xf32>
    %374 = arith.mulf %371, %371 : vector<32x128xf32>
    %cst_117 = arith.constant dense<0.000000e+00> : vector<32xf32>
    %375 = vector.multi_reduction <add>, %374, %cst_117 [1] : vector<32x128xf32> to vector<32xf32>
    %376 = vector.shape_cast %375 : vector<32xf32> to vector<32x1xf32>
    %cst_118 = arith.constant 0.00819672085 : f32
    %377 = vector.broadcast %cst_118 : f32 to vector<32x1xf32>
    %378 = arith.mulf %373, %377 : vector<32x1xf32>
    %cst_119 = arith.constant 0.00819672085 : f32
    %379 = vector.broadcast %cst_119 : f32 to vector<32x1xf32>
    %380 = arith.mulf %376, %379 : vector<32x1xf32>
    %381 = arith.mulf %378, %378 : vector<32x1xf32>
    %382 = arith.subf %380, %381 : vector<32x1xf32>
    %cst_120 = arith.constant 0.000000e+00 : f32
    %383 = vector.broadcast %cst_120 : f32 to vector<32x1xf32>
    %384 = arith.maximumf %382, %383 : vector<32x1xf32>
    %c0_121 = arith.constant 0 : index
    %c51 = arith.constant 51 : index
    %385 = vector.load %arg4[%c0_121, %c51] : memref<32x53xf32, #tpu.memory_space<vmem>>, vector<32x1xf32>
    %c0_122 = arith.constant 0 : index
    %c52 = arith.constant 52 : index
    %386 = vector.load %arg4[%c0_122, %c52] : memref<32x53xf32, #tpu.memory_space<vmem>>, vector<32x1xf32>
    %387 = vector.broadcast %378 : vector<32x1xf32> to vector<32x128xf32>
    %388 = arith.subf %371, %387 : vector<32x128xf32>
    %cst_123 = arith.constant 9.99999974E-6 : f32
    %389 = vector.broadcast %cst_123 : f32 to vector<32x1xf32>
    %390 = arith.addf %384, %389 : vector<32x1xf32>
    %391 = math.rsqrt %390 : vector<32x1xf32>
    %392 = vector.broadcast %391 : vector<32x1xf32> to vector<32x128xf32>
    %393 = arith.mulf %388, %392 : vector<32x128xf32>
    %394 = vector.broadcast %385 : vector<32x1xf32> to vector<32x128xf32>
    %395 = arith.mulf %393, %394 : vector<32x128xf32>
    %396 = vector.broadcast %386 : vector<32x1xf32> to vector<32x128xf32>
    %397 = arith.addf %395, %396 : vector<32x128xf32>
    %cst_124 = arith.constant 0.000000e+00 : f32
    %398 = vector.broadcast %cst_124 : f32 to vector<32x128xf32>
    %399 = arith.maximumf %397, %398 : vector<32x128xf32>
    %400 = vector.broadcast %0 : vector<1x128xf32> to vector<32x128xf32>
    %401 = arith.mulf %399, %400 : vector<32x128xf32>
    %c0_125 = arith.constant 0 : index
    %c0_126 = arith.constant 0 : index
    %402 = vector.load %arg4[%c0_125, %c0_126] : memref<32x53xf32, #tpu.memory_space<vmem>>, vector<32x32xf32>
    %c0_127 = arith.constant 0 : index
    %c32 = arith.constant 32 : index
    %403 = vector.load %arg4[%c0_127, %c32] : memref<32x53xf32, #tpu.memory_space<vmem>>, vector<32x1xf32>
    %cst_128 = arith.constant dense<0.000000e+00> : vector<32x128xf32>
    %404 = tpu.matmul %402, %401, %cst_128 {dimension_numbers = #tpu.dot_dimension_numbers<[1], [0], [0], [1], [0, 0, 1, 1], [], []>} : vector<32x32xf32>, vector<32x128xf32>, vector<32x128xf32> -> vector<32x128xf32>
    %c0_129 = arith.constant 0 : index
    %c0_130 = arith.constant 0 : index
    %405 = vector.load %arg1[%c0_129, %c0_130] : memref<128x128xf32, #tpu.memory_space<vmem>>, vector<128x128xf32>
    %cst_131 = arith.constant dense<0.000000e+00> : vector<32x128xf32>
    %406 = tpu.matmul %404, %405, %cst_131 {dimension_numbers = #tpu.dot_dimension_numbers<[1], [0], [0], [1], [0, 0, 1, 1], [], []>} : vector<32x128xf32>, vector<128x128xf32>, vector<32x128xf32> -> vector<32x128xf32>
    %407 = vector.broadcast %403 : vector<32x1xf32> to vector<32x128xf32>
    %408 = arith.addf %406, %407 : vector<32x128xf32>
    %c0_132 = arith.constant 0 : index
    %c0_133 = arith.constant 0 : index
    %409 = vector.load %arg5[%c0_132, %c0_133] : memref<32x128xf32, #tpu.memory_space<vmem>>, vector<32x128xf32>
    tpu.vector_store %arg5[%c0_132, %c0_133], %408 {strides = array<i32>} : memref<32x128xf32, #tpu.memory_space<vmem>>, vector<32x128xf32>,
    return
  }
}

</mosaic_0001>

<llo_original>
// kernel: densenet_forward.1
$region0: #{densenet_forward.1}
  #allocation0 [shape = 'u32[]', space=smem, size = 0x4, offset = 0x4, fixed_abs, tag = 'smem constant byte address 0x4 - core index']
  #allocation1 [shape = 'u32[144,128]{1,0:T(1,128)}', space=vmem, size = 0x12000, scoped, tag = 'internal scratch']
  %s0 = inlined_call_operand.vmem [shape: f32[3,128], index: 0, kind: input, shape index: {}]
  %s1 = inlined_call_operand.hbm [shape: f32[128,128], index: 1, kind: input, shape index: {}]
  %s2 = inlined_call_operand.vmem [shape: bf16[7,128], index: 2, kind: input, shape index: {}]
  %s3 = inlined_call_operand.hbm [shape: bf16[48,1280], index: 3, kind: input, shape index: {}]
  %s4 = inlined_call_operand.vmem [shape: f32[32,53], index: 4, kind: input, shape index: {}]
  %s5 = inlined_call_operand.vmem [shape: f32[32,128], index: 5, kind: output, shape index: {}]
  %s6 = sld [smem:[#allocation0]]
  $region38: #{densenet_forward.1} parent=0
    _
  %s8 = ssub.s32 1, %s6
  %s9 = scalar_select 0, %s8, %s6
  $region1: #{densenet_forward.1} parent=0
    #allocation2 [shape = 'u8[65536]{0}', space=vmem, size = 0x10000, scoped, tag = 'input window, operand 1, single buffered']
    #allocation3 [shape = 's32[1]{0}', space=sflag, size = 0x4, scoped, tag = 'scoped memory for densenet_forward.1']
    #allocation4 [shape = 'u8[122880]{0}', space=vmem, size = 0x1e000, scoped, tag = 'input window, operand 3, single buffered']
    #allocation5 [shape = 's32[1]{0}', space=sflag, size = 0x4, scoped, tag = 'scoped memory for densenet_forward.1']
    %10 = vsyncpa [#allocation3], 0
    %11 = vsyncpa [#allocation5], 0
    // Predicated region
    $region2: #{densenet_forward.1} parent=1 // pred_check
      _
    $region3: #{densenet_forward.1} parent=1 // pred_check_branch
      %13 = sbr.rel (0) target = $region5
    $region4: #{densenet_forward.1} parent=1 // pred_region
      _
    $region5: #{densenet_forward.1} parent=1 // pred_fallthru
      _
    // Predicated region
    $region6: #{densenet_forward.1} parent=1 // pred_check
      _
    $region7: #{densenet_forward.1} parent=1 // pred_check_branch
      %15 = sbr.rel (0) target = $region9
    $region8: #{densenet_forward.1} parent=1 // pred_region
      %s17 = ssub.s32 2048, 2048
      %18 = vsyncadd [#allocation3], %s17
      %s19 = sshll.u32 [#allocation2], 4
      %s20 = int_to_ptr.vmem [resolvable:$true] %s19
      %25 = dma.hbm_to_vmem [thread:$0]  %s1, 2048, %s20, [#allocation3], 128, 128, 8
    $region9: #{densenet_forward.1} parent=1 // pred_fallthru
      _
    // Predicated region
    $region10: #{densenet_forward.1} parent=1 // pred_check
      _
    $region11: #{densenet_forward.1} parent=1 // pred_check_branch
      %27 = sbr.rel (0) target = $region13
    $region12: #{densenet_forward.1} parent=1 // pred_region
      _
    $region13: #{densenet_forward.1} parent=1 // pred_fallthru
      _
    // Predicated region
    $region14: #{densenet_forward.1} parent=1 // pred_check
      _
    $region15: #{densenet_forward.1} parent=1 // pred_check_branch
      %29 = sbr.rel (0) target = $region17
    $region16: #{densenet_forward.1} parent=1 // pred_region
      %s31 = ssub.s32 3840, 3840
      %32 = vsyncadd [#allocation5], %s31
      %s33 = sshll.u32 [#allocation4], 4
      %s34 = int_to_ptr.vmem [resolvable:$true] %s33
      %39 = dma.hbm_to_vmem [thread:$0]  %s3, 3840, %s34, [#allocation5], 640, 640, 40
    $region17: #{densenet_forward.1} parent=1 // pred_fallthru
      _
    // Predicated region
    $region18: #{densenet_forward.1} parent=1 // pred_check
      _
    $region19: #{densenet_forward.1} parent=1 // pred_check_branch
      %41 = sbr.rel (0) target = $region21
    $region20: #{densenet_forward.1} parent=1 // pred_region
      _
    $region21: #{densenet_forward.1} parent=1 // pred_fallthru
      _
    // Predicated region
    $region22: #{densenet_forward.1} parent=1 // pred_check
      _
    $region23: #{densenet_forward.1} parent=1 // pred_check_branch
      %43 = sbr.rel (0) target = $region25
    $region24: #{densenet_forward.1} parent=1 // pred_region
      %44 = dma.done [#allocation3], 2048
    $region25: #{densenet_forward.1} parent=1 // pred_fallthru
      _
    // Predicated region
    $region26: #{densenet_forward.1} parent=1 // pred_check
      _
    $region27: #{densenet_forward.1} parent=1 // pred_check_branch
      %46 = sbr.rel (0) target = $region29
    $region28: #{densenet_forward.1} parent=1 // pred_region
      %47 = dma.done [#allocation5], 3840
    $region29: #{densenet_forward.1} parent=1 // pred_fallthru
      _
    %v49 = vld [vmem:[%s0] sm:$0x1]
    %v50 = vld [vmem:[%s0 + $0x1] sm:$0x1]
    %v51 = vld [vmem:[%s0 + $0x2] sm:$0x1]
    %v52 = vld [vmem:[#allocation4] sm:$0xf]
    %v53 = vld [vmem:[#allocation4 + $0x28] sm:$0xf]
    %v54 = vld [vmem:[#allocation4 + $0x50] sm:$0xf]
    %v55 = vld [vmem:[#allocation4 + $0x78] sm:$0xf]
    %v56 = vld [vmem:[%s2] sm:$0xf]
    %v61 = vunpack.c.l.b16 %v52
    %v62 = vunpack.c.l.b16 %v53
    %v63 = vunpack.c.l.b16 %v54
    %v64 = vunpack.c.l.b16 %v55
    %v65 = vpack.c.b16 %v62, %v61
    %v66 = vpack.c.b16 %v64, %v63
    %vm67 = vcmask 56320
    %v69 = vsel %vm67, %v65, 0
    %v72 = vsel %vm67, %v66, 0
    %vm74 = vcmask 1042432
    %vm75 = vcmask 1043456
    %v76 = vsel %vm74, 4294967295, 65535
    %v77 = vsel %vm75, %v76, 0
    %v79 = vand.u32 %v56, %v77
    %81 = vmatprep.subr.bf16.mxu0 0
    %82 = vmatpush1.bf16.msra.mxu0 %v79
    %83 = vmatprep.subr.bf16.mxu0 0
    %84 = vmatpush1.bf16.msra.mxu0 0
    %85 = vmatprep.subr.bf16.mxu0 0
    %86 = vmatpush1.bf16.msra.mxu0 0
    %87 = vmatprep.subr.bf16.mxu0 0
    %88 = vmatpush1.bf16.msra.mxu0 0
    %89 = vmatprep.subr.bf16.mxu0 0
    %90 = vmatpush1.bf16.msra.mxu0 0
    %91 = vmatprep.subr.bf16.mxu0 0
    %92 = vmatpush1.bf16.msra.mxu0 0
    %93 = vmatprep.subr.bf16.mxu0 0
    %94 = vmatpush1.bf16.msra.mxu0 0
    %95 = vmatprep.subr.bf16.mxu0 0
    %96 = vmatpush1.bf16.msra.mxu0 0
    %97 = vmatprep.subr.bf16.mxu0 0
    %98 = vmatpush1.bf16.msra.mxu0 0
    %99 = vmatprep.subr.bf16.mxu0 0
    %100 = vmatpush1.bf16.msra.mxu0 0
    %101 = vmatprep.subr.bf16.mxu0 0
    %102 = vmatpush1.bf16.msra.mxu0 0
    %103 = vmatprep.subr.bf16.mxu0 0
    %104 = vmatpush1.bf16.msra.mxu0 0
    %105 = vmatprep.subr.bf16.mxu0 0
    %106 = vmatpush1.bf16.msra.mxu0 0
    %107 = vmatprep.subr.bf16.mxu0 0
    %108 = vmatpush1.bf16.msra.mxu0 0
    %109 = vmatprep.subr.bf16.mxu0 0
    %110 = vmatpush1.bf16.msra.mxu0 0
    %111 = vmatprep.subr.bf16.mxu0 0
    %112 = vmatpush1.bf16.msra.mxu0 0
    %113 = vmatprep.mubr.bf16.mxu0 0
    %114 = vmatmul.mubr.bf16.gmra.mrb[0].mxu0 %v69
    %v115 = vpop.f32.mrb[0].mxu0
    %v116 = vadd.f32 0.0, %v115
    %v117 = vpop.f32.mrb[0].mxu0
    %v118 = vpop.f32.mrb[0].mxu0
    %v119 = vadd.f32 0.0, %v118
    %v120 = vpop.f32.mrb[0].mxu0
    %121 = vmatprep.mubr.bf16.mxu0 0
    %122 = vmatmul.mubr.bf16.gmra.mrb[0].mxu0 %v72
    %v123 = vpop.f32.mrb[0].mxu0
    %v124 = vadd.f32 0.0, %v123
    %v125 = vpop.f32.mrb[0].mxu0
    %v126 = vpop.f32.mrb[0].mxu0
    %v127 = vadd.f32 0.0, %v126
    %v128 = vpop.f32.mrb[0].mxu0
    %129 = vdwg.mxu0
    %v130 = vpack.c.bf16 %v119, %v116
    %v131 = vpack.c.bf16 %v127, %v124
    %v132 = vld [vmem:[#allocation4 + $0x4] sm:$0xf]
    %v133 = vld [vmem:[#allocation4 + $0x2c] sm:$0xf]
    %v134 = vld [vmem:[#allocation4 + $0x54] sm:$0xf]
    %v135 = vld [vmem:[#allocation4 + $0x7c] sm:$0xf]
    %v136 = vld [vmem:[#allocation4 + $0xa4] sm:$0xf]
    %v137 = vld [vmem:[#allocation4 + $0xcc] sm:$0xf]
    %v144 = vunpack.c.l.b16 %v132
    %v145 = vunpack.c.l.b16 %v133
    %v146 = vunpack.c.l.b16 %v134
    %v147 = vunpack.c.l.b16 %v135
    %v148 = vunpack.c.l.b16 %v136
    %v149 = vunpack.c.l.b16 %v137
    %v150 = vpack.c.b16 %v145, %v144
    %v151 = vpack.c.b16 %v147, %v146
    %v152 = vpack.c.b16 %v149, %v148
    %vm153 = vcmask 261120
    %v155 = vsel %vm153, %v150, 0
    %v158 = vsel %vm153, %v151, 0
    %v161 = vsel %vm153, %v152, 0
    %163 = vmatprep.subr.bf16.mxu0 0
    %164 = vmatpush1.bf16.msra.mxu0 %v130
    %165 = vmatprep.subr.bf16.mxu0 0
    %166 = vmatpush1.bf16.msra.mxu0 %v131
    %167 = vmatprep.subr.bf16.mxu0 0
    %168 = vmatpush1.bf16.msra.mxu0 0
    %169 = vmatprep.subr.bf16.mxu0 0
    %170 = vmatpush1.bf16.msra.mxu0 0
    %171 = vmatprep.subr.bf16.mxu0 0
    %172 = vmatpush1.bf16.msra.mxu0 0
    %173 = vmatprep.subr.bf16.mxu0 0
    %174 = vmatpush1.bf16.msra.mxu0 0
    %175 = vmatprep.subr.bf16.mxu0 0
    %176 = vmatpush1.bf16.msra.mxu0 0
    %177 = vmatprep.subr.bf16.mxu0 0
    %178 = vmatpush1.bf16.msra.mxu0 0
    %179 = vmatprep.subr.bf16.mxu0 0
    %180 = vmatpush1.bf16.msra.mxu0 0
    %181 = vmatprep.subr.bf16.mxu0 0
    %182 = vmatpush1.bf16.msra.mxu0 0
    %183 = vmatprep.subr.bf16.mxu0 0
    %184 = vmatpush1.bf16.msra.mxu0 0
    %185 = vmatprep.subr.bf16.mxu0 0
    %186 = vmatpush1.bf16.msra.mxu0 0
    %187 = vmatprep.subr.bf16.mxu0 0
    %188 = vmatpush1.bf16.msra.mxu0 0
    %189 = vmatprep.subr.bf16.mxu0 0
    %190 = vmatpush1.bf16.msra.mxu0 0
    %191 = vmatprep.subr.bf16.mxu0 0
    %192 = vmatpush1.bf16.msra.mxu0 0
    %193 = vmatprep.subr.bf16.mxu0 0
    %194 = vmatpush1.bf16.msra.mxu0 0
    %195 = vmatprep.mubr.bf16.mxu0 0
    %196 = vmatmul.mubr.bf16.gmra.mrb[0].mxu0 %v155
    %v197 = vpop.f32.mrb[0].mxu0
    %v198 = vadd.f32 0.0, %v197
    %v199 = vpop.f32.mrb[0].mxu0
    %v200 = vpop.f32.mrb[0].mxu0
    %v201 = vadd.f32 0.0, %v200
    %v202 = vpop.f32.mrb[0].mxu0
    %203 = vmatprep.mubr.bf16.mxu0 0
    %204 = vmatmul.mubr.bf16.gmra.mrb[0].mxu0 %v158
    %v205 = vpop.f32.mrb[0].mxu0
    %v206 = vadd.f32 0.0, %v205
    %v207 = vpop.f32.mrb[0].mxu0
    %v208 = vpop.f32.mrb[0].mxu0
    %v209 = vadd.f32 0.0, %v208
    %v210 = vpop.f32.mrb[0].mxu0
    %211 = vmatprep.mubr.bf16.mxu0 0
    %212 = vmatmul.mubr.bf16.gmra.mrb[0].mxu0 %v161
    %v213 = vpop.f32.mrb[0].mxu0
    %v214 = vadd.f32 0.0, %v213
    %v215 = vpop.f32.mrb[0].mxu0
    %v216 = vpop.f32.mrb[0].mxu0
    %v217 = vadd.f32 0.0, %v216
    %v218 = vpop.f32.mrb[0].mxu0
    %219 = vdwg.mxu0
    %220 = vrot.lane.b32.xlu0 %v198, 1
    %v221 = vpop.permute.xlu0 %220
    %222 = vrot.lane.b32.xlu0 %v201, 1
    %v223 = vpop.permute.xlu0 %222
    %v224 = vlaneseq
    %v225 = vshrl.u32 %v224, 7
    %v226 = vsub.s32 0, %v225
    %v227 = vrot.slane %v50, %v226
    %v228 = vmul.f32 %v221, %v227
    %v229 = vmul.f32 %v223, %v227
    %230 = vrot.lane.b32.xlu0 %v214, 127
    %v231 = vpop.permute.xlu0 %230
    %232 = vrot.lane.b32.xlu0 %v217, 127
    %v233 = vpop.permute.xlu0 %232
    %v234 = vlaneseq
    %v235 = vshrl.u32 %v234, 7
    %v236 = vsub.s32 0, %v235
    %v237 = vrot.slane %v51, %v236
    %v238 = vmul.f32 %v231, %v237
    %v239 = vmul.f32 %v233, %v237
    %v240 = vadd.f32 %v228, %v206
    %v241 = vadd.f32 %v229, %v209
    %v242 = vadd.f32 %v240, %v238
    %v243 = vadd.f32 %v241, %v239
    %244 = vadd.xlane.f32.xlu0 %v242
    %v245 = vpop.xlane.xlu0 %244
    %246 = vadd.xlane.f32.xlu0 %v243
    %v247 = vpop.xlane.xlu0 %246
    %v248 = vmul.f32 %v242, %v242
    %v249 = vmul.f32 %v243, %v243
    %250 = vadd.xlane.f32.xlu0 %v248
    %v251 = vpop.xlane.xlu0 %250
    %252 = vadd.xlane.f32.xlu0 %v249
    %v253 = vpop.xlane.xlu0 %252
    %v254 = vmul.f32 %v245, 0.008196721
    %v255 = vmul.f32 %v247, 0.008196721
    %v256 = vmul.f32 %v251, 0.008196721
    %v257 = vmul.f32 %v253, 0.008196721
    %v258 = vmul.f32 %v254, %v254
    %v259 = vmul.f32 %v255, %v255
    %v260 = vsub.f32 %v256, %v258
    %v261 = vsub.f32 %v257, %v259
    %v262 = vmax.f32 %v260, 0.0
    %v263 = vmax.f32 %v261, 0.0
    %v264 = vld [vmem:[%s4] sm:$0xff]
    %v265 = vld [vmem:[%s4 + $0x8] sm:$0xff]
    %v266 = vsub.f32 %v242, %v254
    %v267 = vsub.f32 %v243, %v255
    %v268 = vadd.f32 %v262, 1e-05
    %v269 = vadd.f32 %v263, 1e-05
    %v270 = vrsqrt.pop %v268
    %v271 = vrsqrt.pop %v269
    %v272 = vmul.f32 %v266, %v270
    %v273 = vmul.f32 %v267, %v271
    %275 = vset.pattern.permute.xlu0 33
    %276 = vperm.xlu0 %275, %v264
    %v277 = vpop.permute.xlu0 %276
    %280 = vset.pattern.permute.xlu0 33
    %281 = vperm.xlu0 %280, %v265
    %v282 = vpop.permute.xlu0 %281
    %v284 = vmul.f32 %v272, %v277
    %v285 = vmul.f32 %v273, %v282
    %286 = vset.pattern.permute.xlu0 34
    %287 = vperm.xlu0 %286, %v264
    %v288 = vpop.permute.xlu0 %287
    %290 = vset.pattern.permute.xlu0 34
    %291 = vperm.xlu0 %290, %v265
    %v292 = vpop.permute.xlu0 %291
    %v294 = vadd.f32 %v284, %v288
    %v295 = vadd.f32 %v285, %v292
    %v296 = vmax.f32 %v294, 0.0
    %v297 = vmax.f32 %v295, 0.0
    %v298 = vlaneseq
    %v299 = vshrl.u32 %v298, 7
    %v300 = vsub.s32 0, %v299
    %v301 = vrot.slane %v49, %v300
    %v302 = vmul.f32 %v296, %v301
    %v303 = vmul.f32 %v297, %v301
    %v304 = vpack.c.bf16 %v303, %v302
    %v305 = vld [vmem:[#allocation4 + $0x8] sm:$0xf]
    %v306 = vld [vmem:[#allocation4 + $0x30] sm:$0xf]
    %v307 = vld [vmem:[#allocation4 + $0x58] sm:$0xf]
    %v308 = vld [vmem:[#allocation4 + $0x80] sm:$0xf]
    %v309 = vld [vmem:[#allocation4 + $0xa8] sm:$0xf]
    %v310 = vld [vmem:[#allocation4 + $0xd0] sm:$0xf]
    %v317 = vunpack.c.l.b16 %v305
    %v318 = vunpack.c.l.b16 %v306
    %v319 = vunpack.c.l.b16 %v307
    %v320 = vunpack.c.l.b16 %v308
    %v321 = vunpack.c.l.b16 %v309
    %v322 = vunpack.c.l.b16 %v310
    %v323 = vpack.c.b16 %v318, %v317
    %v324 = vpack.c.b16 %v320, %v319
    %v325 = vpack.c.b16 %v322, %v321
    %vm326 = vcmask 130048
    %v328 = vsel %vm326, %v323, 0
    %v331 = vsel %vm326, %v324, 0
    %v334 = vsel %vm326, %v325, 0
    %336 = vmatprep.subr.bf16.mxu0 0
    %337 = vmatpush1.bf16.msra.mxu0 %v304
    %338 = vmatprep.subr.bf16.mxu0 0
    %339 = vmatpush1.bf16.msra.mxu0 0
    %340 = vmatprep.subr.bf16.mxu0 0
    %341 = vmatpush1.bf16.msra.mxu0 0
    %342 = vmatprep.subr.bf16.mxu0 0
    %343 = vmatpush1.bf16.msra.mxu0 0
    %344 = vmatprep.subr.bf16.mxu0 0
    %345 = vmatpush1.bf16.msra.mxu0 0
    %346 = vmatprep.subr.bf16.mxu0 0
    %347 = vmatpush1.bf16.msra.mxu0 0
    %348 = vmatprep.subr.bf16.mxu0 0
    %349 = vmatpush1.bf16.msra.mxu0 0
    %350 = vmatprep.subr.bf16.mxu0 0
    %351 = vmatpush1.bf16.msra.mxu0 0
    %352 = vmatprep.subr.bf16.mxu0 0
    %353 = vmatpush1.bf16.msra.mxu0 0
    %354 = vmatprep.subr.bf16.mxu0 0
    %355 = vmatpush1.bf16.msra.mxu0 0
    %356 = vmatprep.subr.bf16.mxu0 0
    %357 = vmatpush1.bf16.msra.mxu0 0
    %358 = vmatprep.subr.bf16.mxu0 0
    %359 = vmatpush1.bf16.msra.mxu0 0
    %360 = vmatprep.subr.bf16.mxu0 0
    %361 = vmatpush1.bf16.msra.mxu0 0
    %362 = vmatprep.subr.bf16.mxu0 0
    %363 = vmatpush1.bf16.msra.mxu0 0
    %364 = vmatprep.subr.bf16.mxu0 0
    %365 = vmatpush1.bf16.msra.mxu0 0
    %366 = vmatprep.subr.bf16.mxu0 0
    %367 = vmatpush1.bf16.msra.mxu0 0
    %368 = vmatprep.mubr.bf16.mxu0 0
    %369 = vmatmul.mubr.bf16.gmra.mrb[0].mxu0 %v328
    %v370 = vpop.f32.mrb[0].mxu0
    %v371 = vadd.f32 0.0, %v370
    %v372 = vpop.f32.mrb[0].mxu0
    %v373 = vpop.f32.mrb[0].mxu0
    %v374 = vadd.f32 0.0, %v373
    %v375 = vpop.f32.mrb[0].mxu0
    %376 = vmatprep.mubr.bf16.mxu0 0
    %377 = vmatmul.mubr.bf16.gmra.mrb[0].mxu0 %v331
    %v378 = vpop.f32.mrb[0].mxu0
    %v379 = vadd.f32 0.0, %v378
    %v380 = vpop.f32.mrb[0].mxu0
    %v381 = vpop.f32.mrb[0].mxu0
    %v382 = vadd.f32 0.0, %v381
    %v383 = vpop.f32.mrb[0].mxu0
    %384 = vmatprep.mubr.bf16.mxu0 0
    %385 = vmatmul.mubr.bf16.gmra.mrb[0].mxu0 %v334
    %v386 = vpop.f32.mrb[0].mxu0
    %v387 = vadd.f32 0.0, %v386
    %v388 = vpop.f32.mrb[0].mxu0
    %v389 = vpop.f32.mrb[0].mxu0
    %v390 = vadd.f32 0.0, %v389
    %v391 = vpop.f32.mrb[0].mxu0
    %392 = vdwg.mxu0
    %393 = vrot.lane.b32.xlu0 %v371, 1
    %v394 = vpop.permute.xlu0 %393
    %395 = vrot.lane.b32.xlu0 %v374, 1
    %v396 = vpop.permute.xlu0 %395
    %v397 = vmul.f32 %v394, %v227
    %v398 = vmul.f32 %v396, %v227
    %399 = vrot.lane.b32.xlu0 %v387, 127
    %v400 = vpop.permute.xlu0 %399
    %401 = vrot.lane.b32.xlu0 %v390, 127
    %v402 = vpop.permute.xlu0 %401
    %v403 = vmul.f32 %v400, %v237
    %v404 = vmul.f32 %v402, %v237
    %v405 = vadd.f32 %v397, %v379
    %v406 = vadd.f32 %v398, %v382
    %v407 = vadd.f32 %v405, %v403
    %v408 = vadd.f32 %v406, %v404
    %409 = vadd.xlane.f32.xlu0 %v407
    %v410 = vpop.xlane.xlu0 %409
    %411 = vadd.xlane.f32.xlu0 %v408
    %v412 = vpop.xlane.xlu0 %411
    %v413 = vmul.f32 %v407, %v407
    %v414 = vmul.f32 %v408, %v408
    %415 = vadd.xlane.f32.xlu0 %v413
    %v416 = vpop.xlane.xlu0 %415
    %417 = vadd.xlane.f32.xlu0 %v414
    %v418 = vpop.xlane.xlu0 %417
    %v419 = vmul.f32 %v410, 0.008196721
    %v420 = vmul.f32 %v412, 0.008196721
    %v421 = vmul.f32 %v416, 0.008196721
    %v422 = vmul.f32 %v418, 0.008196721
    %v423 = vmul.f32 %v419, %v419
    %v424 = vmul.f32 %v420, %v420
    %v425 = vsub.f32 %v421, %v423
    %v426 = vsub.f32 %v422, %v424
    %v427 = vmax.f32 %v425, 0.0
    %v428 = vmax.f32 %v426, 0.0
    %v429 = vsub.f32 %v407, %v419
    %v430 = vsub.f32 %v408, %v420
    %v431 = vadd.f32 %v427, 1e-05
    %v432 = vadd.f32 %v428, 1e-05
    %v433 = vrsqrt.pop %v431
    %v434 = vrsqrt.pop %v432
    %v435 = vmul.f32 %v429, %v433
    %v436 = vmul.f32 %v430, %v434
    %437 = vset.pattern.permute.xlu0 35
    %438 = vperm.xlu0 %437, %v264
    %v439 = vpop.permute.xlu0 %438
    %441 = vset.pattern.permute.xlu0 35
    %442 = vperm.xlu0 %441, %v265
    %v443 = vpop.permute.xlu0 %442
    %v445 = vmul.f32 %v435, %v439
    %v446 = vmul.f32 %v436, %v443
    %447 = vset.pattern.permute.xlu0 36
    %448 = vperm.xlu0 %447, %v264
    %v449 = vpop.permute.xlu0 %448
    %451 = vset.pattern.permute.xlu0 36
    %452 = vperm.xlu0 %451, %v265
    %v453 = vpop.permute.xlu0 %452
    %v455 = vadd.f32 %v445, %v449
    %v456 = vadd.f32 %v446, %v453
    %v457 = vmax.f32 %v455, 0.0
    %v458 = vmax.f32 %v456, 0.0
    %v459 = vmul.f32 %v457, %v301
    %v460 = vmul.f32 %v458, %v301
    %v461 = vpack.c.bf16 %v460, %v459
    %v462 = vld [vmem:[#allocation4 + $0xc] sm:$0xf]
    %v463 = vld [vmem:[#allocation4 + $0x34] sm:$0xf]
    %v464 = vld [vmem:[#allocation4 + $0x5c] sm:$0xf]
    %v465 = vld [vmem:[#allocation4 + $0x84] sm:$0xf]
    %v470 = vunpack.c.l.b16 %v462
    %v471 = vunpack.c.l.b16 %v463
    %v472 = vunpack.c.l.b16 %v464
    %v473 = vunpack.c.l.b16 %v465
    %v474 = vpack.c.b16 %v471, %v470
    %v475 = vpack.c.b16 %v473, %v472
    %vm476 = vcmask 523264
    %v478 = vsel %vm476, %v474, 0
    %v481 = vsel %vm476, %v475, 0
    %483 = vmatprep.subr.bf16.mxu0 0
    %484 = vmatpush1.bf16.msra.mxu0 %v130
    %485 = vmatprep.subr.bf16.mxu0 0
    %486 = vmatpush1.bf16.msra.mxu0 %v131
    %487 = vmatprep.subr.bf16.mxu0 0
    %488 = vmatpush1.bf16.msra.mxu0 %v304
    %489 = vmatprep.subr.bf16.mxu0 0
    %490 = vmatpush1.bf16.msra.mxu0 %v461
    %491 = vmatprep.subr.bf16.mxu0 0
    %492 = vmatpush1.bf16.msra.mxu0 0
    %493 = vmatprep.subr.bf16.mxu0 0
    %494 = vmatpush1.bf16.msra.mxu0 0
    %495 = vmatprep.subr.bf16.mxu0 0
    %496 = vmatpush1.bf16.msra.mxu0 0
    %497 = vmatprep.subr.bf16.mxu0 0
    %498 = vmatpush1.bf16.msra.mxu0 0
    %499 = vmatprep.subr.bf16.mxu0 0
    %500 = vmatpush1.bf16.msra.mxu0 0
    %501 = vmatprep.subr.bf16.mxu0 0
    %502 = vmatpush1.bf16.msra.mxu0 0
    %503 = vmatprep.subr.bf16.mxu0 0
    %504 = vmatpush1.bf16.msra.mxu0 0
    %505 = vmatprep.subr.bf16.mxu0 0
    %506 = vmatpush1.bf16.msra.mxu0 0
    %507 = vmatprep.subr.bf16.mxu0 0
    %508 = vmatpush1.bf16.msra.mxu0 0
    %509 = vmatprep.subr.bf16.mxu0 0
    %510 = vmatpush1.bf16.msra.mxu0 0
    %511 = vmatprep.subr.bf16.mxu0 0
    %512 = vmatpush1.bf16.msra.mxu0 0
    %513 = vmatprep.subr.bf16.mxu0 0
    %514 = vmatpush1.bf16.msra.mxu0 0
    %515 = vmatprep.mubr.bf16.mxu0 0
    %516 = vmatmul.mubr.bf16.gmra.mrb[0].mxu0 %v478
    %v517 = vpop.f32.mrb[0].mxu0
    %v518 = vadd.f32 0.0, %v517
    %v519 = vpop.f32.mrb[0].mxu0
    %v520 = vpop.f32.mrb[0].mxu0
    %v521 = vadd.f32 0.0, %v520
    %v522 = vpop.f32.mrb[0].mxu0
    %523 = vmatprep.mubr.bf16.mxu0 0
    %524 = vmatmul.mubr.bf16.gmra.mrb[0].mxu0 %v481
    %v525 = vpop.f32.mrb[0].mxu0
    %v526 = vadd.f32 0.0, %v525
    %v527 = vpop.f32.mrb[0].mxu0
    %v528 = vpop.f32.mrb[0].mxu0
    %v529 = vadd.f32 0.0, %v528
    %v530 = vpop.f32.mrb[0].mxu0
    %531 = vdwg.mxu0
    %532 = vadd.xlane.f32.xlu0 %v518
    %v533 = vpop.xlane.xlu0 %532
    %534 = vadd.xlane.f32.xlu0 %v521
    %v535 = vpop.xlane.xlu0 %534
    %536 = vadd.xlane.f32.xlu0 %v526
    %v537 = vpop.xlane.xlu0 %536
    %538 = vadd.xlane.f32.xlu0 %v529
    %v539 = vpop.xlane.xlu0 %538
    %v540 = vmul.f32 %v518, %v518
    %v541 = vmul.f32 %v521, %v521
    %v542 = vmul.f32 %v526, %v526
    %v543 = vmul.f32 %v529, %v529
    %544 = vadd.xlane.f32.xlu0 %v540
    %v545 = vpop.xlane.xlu0 %544
    %546 = vadd.xlane.f32.xlu0 %v541
    %v547 = vpop.xlane.xlu0 %546
    %548 = vadd.xlane.f32.xlu0 %v542
    %v549 = vpop.xlane.xlu0 %548
    %550 = vadd.xlane.f32.xlu0 %v543
    %v551 = vpop.xlane.xlu0 %550
    %v552 = vmul.f32 %v533, 0.008196721
    %v553 = vmul.f32 %v535, 0.008196721
    %v554 = vmul.f32 %v537, 0.008196721
    %v555 = vmul.f32 %v539, 0.008196721
    %v556 = vmul.f32 %v545, 0.008196721
    %v557 = vmul.f32 %v547, 0.008196721
    %v558 = vmul.f32 %v549, 0.008196721
    %v559 = vmul.f32 %v551, 0.008196721
    %v560 = vmul.f32 %v552, %v552
    %v561 = vmul.f32 %v553, %v553
    %v562 = vmul.f32 %v554, %v554
    %v563 = vmul.f32 %v555, %v555
    %v564 = vsub.f32 %v556, %v560
    %v565 = vsub.f32 %v557, %v561
    %v566 = vsub.f32 %v558, %v562
    %v567 = vsub.f32 %v559, %v563
    %v568 = vmax.f32 %v564, 0.0
    %v569 = vmax.f32 %v565, 0.0
    %v570 = vmax.f32 %v566, 0.0
    %v571 = vmax.f32 %v567, 0.0
    %v572 = vld [vmem:[%s4] sm:$0xff]
    %v573 = vld [vmem:[%s4 + $0x8] sm:$0xff]
    %v574 = vld [vmem:[%s4 + $0x10] sm:$0xff]
    %v575 = vld [vmem:[%s4 + $0x18] sm:$0xff]
    %v576 = vsub.f32 %v518, %v552
    %v577 = vsub.f32 %v521, %v553
    %v578 = vsub.f32 %v526, %v554
    %v579 = vsub.f32 %v529, %v555
    %v580 = vadd.f32 %v568, 1e-05
    %v581 = vadd.f32 %v569, 1e-05
    %v582 = vadd.f32 %v570, 1e-05
    %v583 = vadd.f32 %v571, 1e-05
    %v584 = vrsqrt.pop %v580
    %v585 = vrsqrt.pop %v581
    %v586 = vrsqrt.pop %v582
    %v587 = vrsqrt.pop %v583
    %v588 = vmul.f32 %v576, %v584
    %v589 = vmul.f32 %v577, %v585
    %v590 = vmul.f32 %v578, %v586
    %v591 = vmul.f32 %v579, %v587
    %593 = vset.pattern.permute.xlu0 37
    %594 = vperm.xlu0 %593, %v572
    %v595 = vpop.permute.xlu0 %594
    %598 = vset.pattern.permute.xlu0 37
    %599 = vperm.xlu0 %598, %v573
    %v600 = vpop.permute.xlu0 %599
    %603 = vset.pattern.permute.xlu0 37
    %604 = vperm.xlu0 %603, %v574
    %v605 = vpop.permute.xlu0 %604
    %608 = vset.pattern.permute.xlu0 37
    %609 = vperm.xlu0 %608, %v575
    %v610 = vpop.permute.xlu0 %609
    %v612 = vmul.f32 %v588, %v595
    %v613 = vmul.f32 %v589, %v600
    %v614 = vmul.f32 %v590, %v605
    %v615 = vmul.f32 %v591, %v610
    %616 = vset.pattern.permute.xlu0 38
    %617 = vperm.xlu0 %616, %v572
    %v618 = vpop.permute.xlu0 %617
    %620 = vset.pattern.permute.xlu0 38
    %621 = vperm.xlu0 %620, %v573
    %v622 = vpop.permute.xlu0 %621
    %624 = vset.pattern.permute.xlu0 38
    %625 = vperm.xlu0 %624, %v574
    %v626 = vpop.permute.xlu0 %625
    %628 = vset.pattern.permute.xlu0 38
    %629 = vperm.xlu0 %628, %v575
    %v630 = vpop.permute.xlu0 %629
    %v632 = vadd.f32 %v612, %v618
    %v633 = vadd.f32 %v613, %v622
    %v634 = vadd.f32 %v614, %v626
    %v635 = vadd.f32 %v615, %v630
    %v636 = vmax.f32 %v632, 0.0
    %v637 = vmax.f32 %v633, 0.0
    %v638 = vmax.f32 %v634, 0.0
    %v639 = vmax.f32 %v635, 0.0
    %v640 = vmul.f32 %v636, %v301
    %v641 = vmul.f32 %v637, %v301
    %v642 = vmul.f32 %v638, %v301
    %v643 = vmul.f32 %v639, %v301
    %v644 = vpack.c.bf16 %v641, %v640
    %v645 = vpack.c.bf16 %v643, %v642
    %v646 = vld [vmem:[#allocation4 + $0x10] sm:$0xf]
    %v647 = vld [vmem:[#allocation4 + $0x38] sm:$0xf]
    %v648 = vld [vmem:[#allocation4 + $0x60] sm:$0xf]
    %v649 = vld [vmem:[#allocation4 + $0x88] sm:$0xf]
    %v650 = vld [vmem:[#allocation4 + $0xb0] sm:$0xf]
    %v651 = vld [vmem:[#allocation4 + $0xd8] sm:$0xf]
    %v658 = vunpack.c.l.b16 %v646
    %v659 = vunpack.c.l.b16 %v647
    %v660 = vunpack.c.l.b16 %v648
    %v661 = vunpack.c.l.b16 %v649
    %v662 = vunpack.c.l.b16 %v650
    %v663 = vunpack.c.l.b16 %v651
    %v664 = vpack.c.b16 %v659, %v658
    %v665 = vpack.c.b16 %v661, %v660
    %v666 = vpack.c.b16 %v663, %v662
    %v668 = vsel %vm153, %v664, 0
    %v671 = vsel %vm153, %v665, 0
    %v674 = vsel %vm153, %v666, 0
    %676 = vmatprep.subr.bf16.mxu0 0
    %677 = vmatpush1.bf16.msra.mxu0 %v644
    %678 = vmatprep.subr.bf16.mxu0 0
    %679 = vmatpush1.bf16.msra.mxu0 %v645
    %680 = vmatprep.subr.bf16.mxu0 0
    %681 = vmatpush1.bf16.msra.mxu0 0
    %682 = vmatprep.subr.bf16.mxu0 0
    %683 = vmatpush1.bf16.msra.mxu0 0
    %684 = vmatprep.subr.bf16.mxu0 0
    %685 = vmatpush1.bf16.msra.mxu0 0
    %686 = vmatprep.subr.bf16.mxu0 0
    %687 = vmatpush1.bf16.msra.mxu0 0
    %688 = vmatprep.subr.bf16.mxu0 0
    %689 = vmatpush1.bf16.msra.mxu0 0
    %690 = vmatprep.subr.bf16.mxu0 0
    %691 = vmatpush1.bf16.msra.mxu0 0
    %692 = vmatprep.subr.bf16.mxu0 0
    %693 = vmatpush1.bf16.msra.mxu0 0
    %694 = vmatprep.subr.bf16.mxu0 0
    %695 = vmatpush1.bf16.msra.mxu0 0
    %696 = vmatprep.subr.bf16.mxu0 0
    %697 = vmatpush1.bf16.msra.mxu0 0
    %698 = vmatprep.subr.bf16.mxu0 0
    %699 = vmatpush1.bf16.msra.mxu0 0
    %700 = vmatprep.subr.bf16.mxu0 0
    %701 = vmatpush1.bf16.msra.mxu0 0
    %702 = vmatprep.subr.bf16.mxu0 0
    %703 = vmatpush1.bf16.msra.mxu0 0
    %704 = vmatprep.subr.bf16.mxu0 0
    %705 = vmatpush1.bf16.msra.mxu0 0
    %706 = vmatprep.subr.bf16.mxu0 0
    %707 = vmatpush1.bf16.msra.mxu0 0
    %708 = vmatprep.mubr.bf16.mxu0 0
    %709 = vmatmul.mubr.bf16.gmra.mrb[0].mxu0 %v668
    %v710 = vpop.f32.mrb[0].mxu0
    %v711 = vadd.f32 0.0, %v710
    %v712 = vpop.f32.mrb[0].mxu0
    %v713 = vpop.f32.mrb[0].mxu0
    %v714 = vadd.f32 0.0, %v713
    %v715 = vpop.f32.mrb[0].mxu0
    %716 = vmatprep.mubr.bf16.mxu0 0
    %717 = vmatmul.mubr.bf16.gmra.mrb[0].mxu0 %v671
    %v718 = vpop.f32.mrb[0].mxu0
    %v719 = vadd.f32 0.0, %v718
    %v720 = vpop.f32.mrb[0].mxu0
    %v721 = vpop.f32.mrb[0].mxu0
    %v722 = vadd.f32 0.0, %v721
    %v723 = vpop.f32.mrb[0].mxu0
    %724 = vmatprep.mubr.bf16.mxu0 0
    %725 = vmatmul.mubr.bf16.gmra.mrb[0].mxu0 %v674
    %v726 = vpop.f32.mrb[0].mxu0
    %v727 = vadd.f32 0.0, %v726
    %v728 = vpop.f32.mrb[0].mxu0
    %v729 = vpop.f32.mrb[0].mxu0
    %v730 = vadd.f32 0.0, %v729
    %v731 = vpop.f32.mrb[0].mxu0
    %732 = vdwg.mxu0
    %733 = vrot.lane.b32.xlu0 %v711, 1
    %v734 = vpop.permute.xlu0 %733
    %735 = vrot.lane.b32.xlu0 %v714, 1
    %v736 = vpop.permute.xlu0 %735
    %v737 = vmul.f32 %v734, %v227
    %v738 = vmul.f32 %v736, %v227
    %739 = vrot.lane.b32.xlu0 %v727, 127
    %v740 = vpop.permute.xlu0 %739
    %741 = vrot.lane.b32.xlu0 %v730, 127
    %v742 = vpop.permute.xlu0 %741
    %v743 = vmul.f32 %v740, %v237
    %v744 = vmul.f32 %v742, %v237
    %v745 = vadd.f32 %v737, %v719
    %v746 = vadd.f32 %v738, %v722
    %v747 = vadd.f32 %v745, %v743
    %v748 = vadd.f32 %v746, %v744
    %749 = vadd.xlane.f32.xlu0 %v747
    %v750 = vpop.xlane.xlu0 %749
    %751 = vadd.xlane.f32.xlu0 %v748
    %v752 = vpop.xlane.xlu0 %751
    %v753 = vmul.f32 %v747, %v747
    %v754 = vmul.f32 %v748, %v748
    %755 = vadd.xlane.f32.xlu0 %v753
    %v756 = vpop.xlane.xlu0 %755
    %757 = vadd.xlane.f32.xlu0 %v754
    %v758 = vpop.xlane.xlu0 %757
    %v759 = vmul.f32 %v750, 0.008196721
    %v760 = vmul.f32 %v752, 0.008196721
    %v761 = vmul.f32 %v756, 0.008196721
    %v762 = vmul.f32 %v758, 0.008196721
    %v763 = vmul.f32 %v759, %v759
    %v764 = vmul.f32 %v760, %v760
    %v765 = vsub.f32 %v761, %v763
    %v766 = vsub.f32 %v762, %v764
    %v767 = vmax.f32 %v765, 0.0
    %v768 = vmax.f32 %v766, 0.0
    %v769 = vsub.f32 %v747, %v759
    %v770 = vsub.f32 %v748, %v760
    %v771 = vadd.f32 %v767, 1e-05
    %v772 = vadd.f32 %v768, 1e-05
    %v773 = vrsqrt.pop %v771
    %v774 = vrsqrt.pop %v772
    %v775 = vmul.f32 %v769, %v773
    %v776 = vmul.f32 %v770, %v774
    %777 = vset.pattern.permute.xlu0 39
    %778 = vperm.xlu0 %777, %v264
    %v779 = vpop.permute.xlu0 %778
    %781 = vset.pattern.permute.xlu0 39
    %782 = vperm.xlu0 %781, %v265
    %v783 = vpop.permute.xlu0 %782
    %v785 = vmul.f32 %v775, %v779
    %v786 = vmul.f32 %v776, %v783
    %787 = vset.pattern.permute.xlu0 40
    %788 = vperm.xlu0 %787, %v264
    %v789 = vpop.permute.xlu0 %788
    %791 = vset.pattern.permute.xlu0 40
    %792 = vperm.xlu0 %791, %v265
    %v793 = vpop.permute.xlu0 %792
    %v795 = vadd.f32 %v785, %v789
    %v796 = vadd.f32 %v786, %v793
    %v797 = vmax.f32 %v795, 0.0
    %v798 = vmax.f32 %v796, 0.0
    %v799 = vmul.f32 %v797, %v301
    %v800 = vmul.f32 %v798, %v301
    %v801 = vpack.c.bf16 %v800, %v799
    %v802 = vld [vmem:[#allocation4 + $0x14] sm:$0xf]
    %v803 = vld [vmem:[#allocation4 + $0x3c] sm:$0xf]
    %v804 = vld [vmem:[#allocation4 + $0x64] sm:$0xf]
    %v805 = vld [vmem:[#allocation4 + $0x8c] sm:$0xf]
    %v806 = vld [vmem:[#allocation4 + $0xb4] sm:$0xf]
    %v807 = vld [vmem:[#allocation4 + $0xdc] sm:$0xf]
    %v814 = vunpack.c.l.b16 %v802
    %v815 = vunpack.c.l.b16 %v803
    %v816 = vunpack.c.l.b16 %v804
    %v817 = vunpack.c.l.b16 %v805
    %v818 = vunpack.c.l.b16 %v806
    %v819 = vunpack.c.l.b16 %v807
    %v820 = vpack.c.b16 %v815, %v814
    %v821 = vpack.c.b16 %v817, %v816
    %v822 = vpack.c.b16 %v819, %v818
    %v824 = vsel %vm326, %v820, 0
    %v827 = vsel %vm326, %v821, 0
    %v830 = vsel %vm326, %v822, 0
    %832 = vmatprep.subr.bf16.mxu0 0
    %833 = vmatpush1.bf16.msra.mxu0 %v801
    %834 = vmatprep.subr.bf16.mxu0 0
    %835 = vmatpush1.bf16.msra.mxu0 0
    %836 = vmatprep.subr.bf16.mxu0 0
    %837 = vmatpush1.bf16.msra.mxu0 0
    %838 = vmatprep.subr.bf16.mxu0 0
    %839 = vmatpush1.bf16.msra.mxu0 0
    %840 = vmatprep.subr.bf16.mxu0 0
    %841 = vmatpush1.bf16.msra.mxu0 0
    %842 = vmatprep.subr.bf16.mxu0 0
    %843 = vmatpush1.bf16.msra.mxu0 0
    %844 = vmatprep.subr.bf16.mxu0 0
    %845 = vmatpush1.bf16.msra.mxu0 0
    %846 = vmatprep.subr.bf16.mxu0 0
    %847 = vmatpush1.bf16.msra.mxu0 0
    %848 = vmatprep.subr.bf16.mxu0 0
    %849 = vmatpush1.bf16.msra.mxu0 0
    %850 = vmatprep.subr.bf16.mxu0 0
    %851 = vmatpush1.bf16.msra.mxu0 0
    %852 = vmatprep.subr.bf16.mxu0 0
    %853 = vmatpush1.bf16.msra.mxu0 0
    %854 = vmatprep.subr.bf16.mxu0 0
    %855 = vmatpush1.bf16.msra.mxu0 0
    %856 = vmatprep.subr.bf16.mxu0 0
    %857 = vmatpush1.bf16.msra.mxu0 0
    %858 = vmatprep.subr.bf16.mxu0 0
    %859 = vmatpush1.bf16.msra.mxu0 0
    %860 = vmatprep.subr.bf16.mxu0 0
    %861 = vmatpush1.bf16.msra.mxu0 0
    %862 = vmatprep.subr.bf16.mxu0 0
    %863 = vmatpush1.bf16.msra.mxu0 0
    %864 = vmatprep.mubr.bf16.mxu0 0
    %865 = vmatmul.mubr.bf16.gmra.mrb[0].mxu0 %v824
    %v866 = vpop.f32.mrb[0].mxu0
    %v867 = vadd.f32 0.0, %v866
    %v868 = vpop.f32.mrb[0].mxu0
    %v869 = vpop.f32.mrb[0].mxu0
    %v870 = vadd.f32 0.0, %v869
    %v871 = vpop.f32.mrb[0].mxu0
    %872 = vmatprep.mubr.bf16.mxu0 0
    %873 = vmatmul.mubr.bf16.gmra.mrb[0].mxu0 %v827
    %v874 = vpop.f32.mrb[0].mxu0
    %v875 = vadd.f32 0.0, %v874
    %v876 = vpop.f32.mrb[0].mxu0
    %v877 = vpop.f32.mrb[0].mxu0
    %v878 = vadd.f32 0.0, %v877
    %v879 = vpop.f32.mrb[0].mxu0
    %880 = vmatprep.mubr.bf16.mxu0 0
    %881 = vmatmul.mubr.bf16.gmra.mrb[0].mxu0 %v830
    %v882 = vpop.f32.mrb[0].mxu0
    %v883 = vadd.f32 0.0, %v882
    %v884 = vpop.f32.mrb[0].mxu0
    %v885 = vpop.f32.mrb[0].mxu0
    %v886 = vadd.f32 0.0, %v885
    %v887 = vpop.f32.mrb[0].mxu0
    %888 = vdwg.mxu0
    %889 = vrot.lane.b32.xlu0 %v867, 1
    %v890 = vpop.permute.xlu0 %889
    %891 = vrot.lane.b32.xlu0 %v870, 1
    %v892 = vpop.permute.xlu0 %891
    %v893 = vmul.f32 %v890, %v227
    %v894 = vmul.f32 %v892, %v227
    %895 = vrot.lane.b32.xlu0 %v883, 127
    %v896 = vpop.permute.xlu0 %895
    %897 = vrot.lane.b32.xlu0 %v886, 127
    %v898 = vpop.permute.xlu0 %897
    %v899 = vmul.f32 %v896, %v237
    %v900 = vmul.f32 %v898, %v237
    %v901 = vadd.f32 %v893, %v875
    %v902 = vadd.f32 %v894, %v878
    %v903 = vadd.f32 %v901, %v899
    %v904 = vadd.f32 %v902, %v900
    %905 = vadd.xlane.f32.xlu0 %v903
    %v906 = vpop.xlane.xlu0 %905
    %907 = vadd.xlane.f32.xlu0 %v904
    %v908 = vpop.xlane.xlu0 %907
    %v909 = vmul.f32 %v903, %v903
    %v910 = vmul.f32 %v904, %v904
    %911 = vadd.xlane.f32.xlu0 %v909
    %v912 = vpop.xlane.xlu0 %911
    %913 = vadd.xlane.f32.xlu0 %v910
    %v914 = vpop.xlane.xlu0 %913
    %v915 = vmul.f32 %v906, 0.008196721
    %v916 = vmul.f32 %v908, 0.008196721
    %v917 = vmul.f32 %v912, 0.008196721
    %v918 = vmul.f32 %v914, 0.008196721
    %v919 = vmul.f32 %v915, %v915
    %v920 = vmul.f32 %v916, %v916
    %v921 = vsub.f32 %v917, %v919
    %v922 = vsub.f32 %v918, %v920
    %v923 = vmax.f32 %v921, 0.0
    %v924 = vmax.f32 %v922, 0.0
    %v925 = vsub.f32 %v903, %v915
    %v926 = vsub.f32 %v904, %v916
    %v927 = vadd.f32 %v923, 1e-05
    %v928 = vadd.f32 %v924, 1e-05
    %v929 = vrsqrt.pop %v927
    %v930 = vrsqrt.pop %v928
    %v931 = vmul.f32 %v925, %v929
    %v932 = vmul.f32 %v926, %v930
    %933 = vset.pattern.permute.xlu0 41
    %934 = vperm.xlu0 %933, %v264
    %v935 = vpop.permute.xlu0 %934
    %937 = vset.pattern.permute.xlu0 41
    %938 = vperm.xlu0 %937, %v265
    %v939 = vpop.permute.xlu0 %938
    %v941 = vmul.f32 %v931, %v935
    %v942 = vmul.f32 %v932, %v939
    %943 = vset.pattern.permute.xlu0 42
    %944 = vperm.xlu0 %943, %v264
    %v945 = vpop.permute.xlu0 %944
    %947 = vset.pattern.permute.xlu0 42
    %948 = vperm.xlu0 %947, %v265
    %v949 = vpop.permute.xlu0 %948
    %v951 = vadd.f32 %v941, %v945
    %v952 = vadd.f32 %v942, %v949
    %v953 = vmax.f32 %v951, 0.0
    %v954 = vmax.f32 %v952, 0.0
    %v955 = vmul.f32 %v953, %v301
    %v956 = vmul.f32 %v954, %v301
    %v957 = vpack.c.bf16 %v956, %v955
    %v958 = vld [vmem:[#allocation4 + $0x18] sm:$0xf]
    %v959 = vld [vmem:[#allocation4 + $0x40] sm:$0xf]
    %v960 = vld [vmem:[#allocation4 + $0x68] sm:$0xf]
    %v961 = vld [vmem:[#allocation4 + $0x90] sm:$0xf]
    %v966 = vunpack.c.l.b16 %v958
    %v967 = vunpack.c.l.b16 %v959
    %v968 = vunpack.c.l.b16 %v960
    %v969 = vunpack.c.l.b16 %v961
    %v970 = vpack.c.b16 %v967, %v966
    %v971 = vpack.c.b16 %v969, %v968
    %v973 = vsel %vm476, %v970, 0
    %v976 = vsel %vm476, %v971, 0
    %978 = vmatprep.subr.bf16.mxu0 0
    %979 = vmatpush1.bf16.msra.mxu0 %v644
    %980 = vmatprep.subr.bf16.mxu0 0
    %981 = vmatpush1.bf16.msra.mxu0 %v645
    %982 = vmatprep.subr.bf16.mxu0 0
    %983 = vmatpush1.bf16.msra.mxu0 %v801
    %984 = vmatprep.subr.bf16.mxu0 0
    %985 = vmatpush1.bf16.msra.mxu0 %v957
    %986 = vmatprep.subr.bf16.mxu0 0
    %987 = vmatpush1.bf16.msra.mxu0 0
    %988 = vmatprep.subr.bf16.mxu0 0
    %989 = vmatpush1.bf16.msra.mxu0 0
    %990 = vmatprep.subr.bf16.mxu0 0
    %991 = vmatpush1.bf16.msra.mxu0 0
    %992 = vmatprep.subr.bf16.mxu0 0
    %993 = vmatpush1.bf16.msra.mxu0 0
    %994 = vmatprep.subr.bf16.mxu0 0
    %995 = vmatpush1.bf16.msra.mxu0 0
    %996 = vmatprep.subr.bf16.mxu0 0
    %997 = vmatpush1.bf16.msra.mxu0 0
    %998 = vmatprep.subr.bf16.mxu0 0
    %999 = vmatpush1.bf16.msra.mxu0 0
    %1000 = vmatprep.subr.bf16.mxu0 0
    %1001 = vmatpush1.bf16.msra.mxu0 0
    %1002 = vmatprep.subr.bf16.mxu0 0
    %1003 = vmatpush1.bf16.msra.mxu0 0
    %1004 = vmatprep.subr.bf16.mxu0 0
    %1005 = vmatpush1.bf16.msra.mxu0 0
    %1006 = vmatprep.subr.bf16.mxu0 0
    %1007 = vmatpush1.bf16.msra.mxu0 0
    %1008 = vmatprep.subr.bf16.mxu0 0
    %1009 = vmatpush1.bf16.msra.mxu0 0
    %1010 = vmatprep.mubr.bf16.mxu0 0
    %1011 = vmatmul.mubr.bf16.gmra.mrb[0].mxu0 %v973
    %v1012 = vpop.f32.mrb[0].mxu0
    %v1013 = vadd.f32 0.0, %v1012
    %v1014 = vpop.f32.mrb[0].mxu0
    %v1015 = vpop.f32.mrb[0].mxu0
    %v1016 = vadd.f32 0.0, %v1015
    %v1017 = vpop.f32.mrb[0].mxu0
    %1018 = vmatprep.mubr.bf16.mxu0 0
    %1019 = vmatmul.mubr.bf16.gmra.mrb[0].mxu0 %v976
    %v1020 = vpop.f32.mrb[0].mxu0
    %v1021 = vadd.f32 0.0, %v1020
    %v1022 = vpop.f32.mrb[0].mxu0
    %v1023 = vpop.f32.mrb[0].mxu0
    %v1024 = vadd.f32 0.0, %v1023
    %v1025 = vpop.f32.mrb[0].mxu0
    %1026 = vdwg.mxu0
    %1027 = vadd.xlane.f32.xlu0 %v1013
    %v1028 = vpop.xlane.xlu0 %1027
    %1029 = vadd.xlane.f32.xlu0 %v1016
    %v1030 = vpop.xlane.xlu0 %1029
    %1031 = vadd.xlane.f32.xlu0 %v1021
    %v1032 = vpop.xlane.xlu0 %1031
    %1033 = vadd.xlane.f32.xlu0 %v1024
    %v1034 = vpop.xlane.xlu0 %1033
    %v1035 = vmul.f32 %v1013, %v1013
    %v1036 = vmul.f32 %v1016, %v1016
    %v1037 = vmul.f32 %v1021, %v1021
    %v1038 = vmul.f32 %v1024, %v1024
    %1039 = vadd.xlane.f32.xlu0 %v1035
    %v1040 = vpop.xlane.xlu0 %1039
    %1041 = vadd.xlane.f32.xlu0 %v1036
    %v1042 = vpop.xlane.xlu0 %1041
    %1043 = vadd.xlane.f32.xlu0 %v1037
    %v1044 = vpop.xlane.xlu0 %1043
    %1045 = vadd.xlane.f32.xlu0 %v1038
    %v1046 = vpop.xlane.xlu0 %1045
    %v1047 = vmul.f32 %v1028, 0.008196721
    %v1048 = vmul.f32 %v1030, 0.008196721
    %v1049 = vmul.f32 %v1032, 0.008196721
    %v1050 = vmul.f32 %v1034, 0.008196721
    %v1051 = vmul.f32 %v1040, 0.008196721
    %v1052 = vmul.f32 %v1042, 0.008196721
    %v1053 = vmul.f32 %v1044, 0.008196721
    %v1054 = vmul.f32 %v1046, 0.008196721
    %v1055 = vmul.f32 %v1047, %v1047
    %v1056 = vmul.f32 %v1048, %v1048
    %v1057 = vmul.f32 %v1049, %v1049
    %v1058 = vmul.f32 %v1050, %v1050
    %v1059 = vsub.f32 %v1051, %v1055
    %v1060 = vsub.f32 %v1052, %v1056
    %v1061 = vsub.f32 %v1053, %v1057
    %v1062 = vsub.f32 %v1054, %v1058
    %v1063 = vmax.f32 %v1059, 0.0
    %v1064 = vmax.f32 %v1060, 0.0
    %v1065 = vmax.f32 %v1061, 0.0
    %v1066 = vmax.f32 %v1062, 0.0
    %v1067 = vsub.f32 %v1013, %v1047
    %v1068 = vsub.f32 %v1016, %v1048
    %v1069 = vsub.f32 %v1021, %v1049
    %v1070 = vsub.f32 %v1024, %v1050
    %v1071 = vadd.f32 %v1063, 1e-05
    %v1072 = vadd.f32 %v1064, 1e-05
    %v1073 = vadd.f32 %v1065, 1e-05
    %v1074 = vadd.f32 %v1066, 1e-05
    %v1075 = vrsqrt.pop %v1071
    %v1076 = vrsqrt.pop %v1072
    %v1077 = vrsqrt.pop %v1073
    %v1078 = vrsqrt.pop %v1074
    %v1079 = vmul.f32 %v1067, %v1075
    %v1080 = vmul.f32 %v1068, %v1076
    %v1081 = vmul.f32 %v1069, %v1077
    %v1082 = vmul.f32 %v1070, %v1078
    %1083 = vset.pattern.permute.xlu0 43
    %1084 = vperm.xlu0 %1083, %v572
    %v1085 = vpop.permute.xlu0 %1084
    %1087 = vset.pattern.permute.xlu0 43
    %1088 = vperm.xlu0 %1087, %v573
    %v1089 = vpop.permute.xlu0 %1088
    %1091 = vset.pattern.permute.xlu0 43
    %1092 = vperm.xlu0 %1091, %v574
    %v1093 = vpop.permute.xlu0 %1092
    %1095 = vset.pattern.permute.xlu0 43
    %1096 = vperm.xlu0 %1095, %v575
    %v1097 = vpop.permute.xlu0 %1096
    %v1099 = vmul.f32 %v1079, %v1085
    %v1100 = vmul.f32 %v1080, %v1089
    %v1101 = vmul.f32 %v1081, %v1093
    %v1102 = vmul.f32 %v1082, %v1097
    %1103 = vset.pattern.permute.xlu0 44
    %1104 = vperm.xlu0 %1103, %v572
    %v1105 = vpop.permute.xlu0 %1104
    %1107 = vset.pattern.permute.xlu0 44
    %1108 = vperm.xlu0 %1107, %v573
    %v1109 = vpop.permute.xlu0 %1108
    %1111 = vset.pattern.permute.xlu0 44
    %1112 = vperm.xlu0 %1111, %v574
    %v1113 = vpop.permute.xlu0 %1112
    %1115 = vset.pattern.permute.xlu0 44
    %1116 = vperm.xlu0 %1115, %v575
    %v1117 = vpop.permute.xlu0 %1116
    %v1119 = vadd.f32 %v1099, %v1105
    %v1120 = vadd.f32 %v1100, %v1109
    %v1121 = vadd.f32 %v1101, %v1113
    %v1122 = vadd.f32 %v1102, %v1117
    %v1123 = vmax.f32 %v1119, 0.0
    %v1124 = vmax.f32 %v1120, 0.0
    %v1125 = vmax.f32 %v1121, 0.0
    %v1126 = vmax.f32 %v1122, 0.0
    %v1127 = vmul.f32 %v1123, %v301
    %v1128 = vmul.f32 %v1124, %v301
    %v1129 = vmul.f32 %v1125, %v301
    %v1130 = vmul.f32 %v1126, %v301
    %v1131 = vpack.c.bf16 %v1128, %v1127
    %v1132 = vpack.c.bf16 %v1130, %v1129
    %v1133 = vld [vmem:[#allocation4 + $0x1c] sm:$0xf]
    %v1134 = vld [vmem:[#allocation4 + $0x44] sm:$0xf]
    %v1135 = vld [vmem:[#allocation4 + $0x6c] sm:$0xf]
    %v1136 = vld [vmem:[#allocation4 + $0x94] sm:$0xf]
    %v1137 = vld [vmem:[#allocation4 + $0xbc] sm:$0xf]
    %v1138 = vld [vmem:[#allocation4 + $0xe4] sm:$0xf]
    %v1145 = vunpack.c.l.b16 %v1133
    %v1146 = vunpack.c.l.b16 %v1134
    %v1147 = vunpack.c.l.b16 %v1135
    %v1148 = vunpack.c.l.b16 %v1136
    %v1149 = vunpack.c.l.b16 %v1137
    %v1150 = vunpack.c.l.b16 %v1138
    %v1151 = vpack.c.b16 %v1146, %v1145
    %v1152 = vpack.c.b16 %v1148, %v1147
    %v1153 = vpack.c.b16 %v1150, %v1149
    %v1155 = vsel %vm153, %v1151, 0
    %v1158 = vsel %vm153, %v1152, 0
    %v1161 = vsel %vm153, %v1153, 0
    %1163 = vmatprep.subr.bf16.mxu0 0
    %1164 = vmatpush1.bf16.msra.mxu0 %v1131
    %1165 = vmatprep.subr.bf16.mxu0 0
    %1166 = vmatpush1.bf16.msra.mxu0 %v1132
    %1167 = vmatprep.subr.bf16.mxu0 0
    %1168 = vmatpush1.bf16.msra.mxu0 0
    %1169 = vmatprep.subr.bf16.mxu0 0
    %1170 = vmatpush1.bf16.msra.mxu0 0
    %1171 = vmatprep.subr.bf16.mxu0 0
    %1172 = vmatpush1.bf16.msra.mxu0 0
    %1173 = vmatprep.subr.bf16.mxu0 0
    %1174 = vmatpush1.bf16.msra.mxu0 0
    %1175 = vmatprep.subr.bf16.mxu0 0
    %1176 = vmatpush1.bf16.msra.mxu0 0
    %1177 = vmatprep.subr.bf16.mxu0 0
    %1178 = vmatpush1.bf16.msra.mxu0 0
    %1179 = vmatprep.subr.bf16.mxu0 0
    %1180 = vmatpush1.bf16.msra.mxu0 0
    %1181 = vmatprep.subr.bf16.mxu0 0
    %1182 = vmatpush1.bf16.msra.mxu0 0
    %1183 = vmatprep.subr.bf16.mxu0 0
    %1184 = vmatpush1.bf16.msra.mxu0 0
    %1185 = vmatprep.subr.bf16.mxu0 0
    %1186 = vmatpush1.bf16.msra.mxu0 0
    %1187 = vmatprep.subr.bf16.mxu0 0
    %1188 = vmatpush1.bf16.msra.mxu0 0
    %1189 = vmatprep.subr.bf16.mxu0 0
    %1190 = vmatpush1.bf16.msra.mxu0 0
    %1191 = vmatprep.subr.bf16.mxu0 0
    %1192 = vmatpush1.bf16.msra.mxu0 0
    %1193 = vmatprep.subr.bf16.mxu0 0
    %1194 = vmatpush1.bf16.msra.mxu0 0
    %1195 = vmatprep.mubr.bf16.mxu0 0
    %1196 = vmatmul.mubr.bf16.gmra.mrb[0].mxu0 %v1155
    %v1197 = vpop.f32.mrb[0].mxu0
    %v1198 = vadd.f32 0.0, %v1197
    %v1199 = vpop.f32.mrb[0].mxu0
    %v1200 = vpop.f32.mrb[0].mxu0
    %v1201 = vadd.f32 0.0, %v1200
    %v1202 = vpop.f32.mrb[0].mxu0
    %1203 = vmatprep.mubr.bf16.mxu0 0
    %1204 = vmatmul.mubr.bf16.gmra.mrb[0].mxu0 %v1158
    %v1205 = vpop.f32.mrb[0].mxu0
    %v1206 = vadd.f32 0.0, %v1205
    %v1207 = vpop.f32.mrb[0].mxu0
    %v1208 = vpop.f32.mrb[0].mxu0
    %v1209 = vadd.f32 0.0, %v1208
    %v1210 = vpop.f32.mrb[0].mxu0
    %1211 = vmatprep.mubr.bf16.mxu0 0
    %1212 = vmatmul.mubr.bf16.gmra.mrb[0].mxu0 %v1161
    %v1213 = vpop.f32.mrb[0].mxu0
    %v1214 = vadd.f32 0.0, %v1213
    %v1215 = vpop.f32.mrb[0].mxu0
    %v1216 = vpop.f32.mrb[0].mxu0
    %v1217 = vadd.f32 0.0, %v1216
    %v1218 = vpop.f32.mrb[0].mxu0
    %1219 = vdwg.mxu0
    %1220 = vrot.lane.b32.xlu0 %v1198, 1
    %v1221 = vpop.permute.xlu0 %1220
    %1222 = vrot.lane.b32.xlu0 %v1201, 1
    %v1223 = vpop.permute.xlu0 %1222
    %v1224 = vmul.f32 %v1221, %v227
    %v1225 = vmul.f32 %v1223, %v227
    %1226 = vrot.lane.b32.xlu0 %v1214, 127
    %v1227 = vpop.permute.xlu0 %1226
    %1228 = vrot.lane.b32.xlu0 %v1217, 127
    %v1229 = vpop.permute.xlu0 %1228
    %v1230 = vmul.f32 %v1227, %v237
    %v1231 = vmul.f32 %v1229, %v237
    %v1232 = vadd.f32 %v1224, %v1206
    %v1233 = vadd.f32 %v1225, %v1209
    %v1234 = vadd.f32 %v1232, %v1230
    %v1235 = vadd.f32 %v1233, %v1231
    %1236 = vadd.xlane.f32.xlu0 %v1234
    %v1237 = vpop.xlane.xlu0 %1236
    %1238 = vadd.xlane.f32.xlu0 %v1235
    %v1239 = vpop.xlane.xlu0 %1238
    %v1240 = vmul.f32 %v1234, %v1234
    %v1241 = vmul.f32 %v1235, %v1235
    %1242 = vadd.xlane.f32.xlu0 %v1240
    %v1243 = vpop.xlane.xlu0 %1242
    %1244 = vadd.xlane.f32.xlu0 %v1241
    %v1245 = vpop.xlane.xlu0 %1244
    %v1246 = vmul.f32 %v1237, 0.008196721
    %v1247 = vmul.f32 %v1239, 0.008196721
    %v1248 = vmul.f32 %v1243, 0.008196721
    %v1249 = vmul.f32 %v1245, 0.008196721
    %v1250 = vmul.f32 %v1246, %v1246
    %v1251 = vmul.f32 %v1247, %v1247
    %v1252 = vsub.f32 %v1248, %v1250
    %v1253 = vsub.f32 %v1249, %v1251
    %v1254 = vmax.f32 %v1252, 0.0
    %v1255 = vmax.f32 %v1253, 0.0
    %v1256 = vsub.f32 %v1234, %v1246
    %v1257 = vsub.f32 %v1235, %v1247
    %v1258 = vadd.f32 %v1254, 1e-05
    %v1259 = vadd.f32 %v1255, 1e-05
    %v1260 = vrsqrt.pop %v1258
    %v1261 = vrsqrt.pop %v1259
    %v1262 = vmul.f32 %v1256, %v1260
    %v1263 = vmul.f32 %v1257, %v1261
    %1264 = vset.pattern.permute.xlu0 45
    %1265 = vperm.xlu0 %1264, %v264
    %v1266 = vpop.permute.xlu0 %1265
    %1268 = vset.pattern.permute.xlu0 45
    %1269 = vperm.xlu0 %1268, %v265
    %v1270 = vpop.permute.xlu0 %1269
    %v1272 = vmul.f32 %v1262, %v1266
    %v1273 = vmul.f32 %v1263, %v1270
    %1274 = vset.pattern.permute.xlu0 46
    %1275 = vperm.xlu0 %1274, %v264
    %v1276 = vpop.permute.xlu0 %1275
    %1278 = vset.pattern.permute.xlu0 46
    %1279 = vperm.xlu0 %1278, %v265
    %v1280 = vpop.permute.xlu0 %1279
    %v1282 = vadd.f32 %v1272, %v1276
    %v1283 = vadd.f32 %v1273, %v1280
    %v1284 = vmax.f32 %v1282, 0.0
    %v1285 = vmax.f32 %v1283, 0.0
    %v1286 = vmul.f32 %v1284, %v301
    %v1287 = vmul.f32 %v1285, %v301
    %v1288 = vpack.c.bf16 %v1287, %v1286
    %v1289 = vld [vmem:[#allocation4 + $0x20] sm:$0xf]
    %v1290 = vld [vmem:[#allocation4 + $0x48] sm:$0xf]
    %v1291 = vld [vmem:[#allocation4 + $0x70] sm:$0xf]
    %v1292 = vld [vmem:[#allocation4 + $0x98] sm:$0xf]
    %v1293 = vld [vmem:[#allocation4 + $0xc0] sm:$0xf]
    %v1294 = vld [vmem:[#allocation4 + $0xe8] sm:$0xf]
    %v1301 = vunpack.c.l.b16 %v1289
    %v1302 = vunpack.c.l.b16 %v1290
    %v1303 = vunpack.c.l.b16 %v1291
    %v1304 = vunpack.c.l.b16 %v1292
    %v1305 = vunpack.c.l.b16 %v1293
    %v1306 = vunpack.c.l.b16 %v1294
    %v1307 = vpack.c.b16 %v1302, %v1301
    %v1308 = vpack.c.b16 %v1304, %v1303
    %v1309 = vpack.c.b16 %v1306, %v1305
    %v1311 = vsel %vm326, %v1307, 0
    %v1314 = vsel %vm326, %v1308, 0
    %v1317 = vsel %vm326, %v1309, 0
    %1319 = vmatprep.subr.bf16.mxu0 0
    %1320 = vmatpush1.bf16.msra.mxu0 %v1288
    %1321 = vmatprep.subr.bf16.mxu0 0
    %1322 = vmatpush1.bf16.msra.mxu0 0
    %1323 = vmatprep.subr.bf16.mxu0 0
    %1324 = vmatpush1.bf16.msra.mxu0 0
    %1325 = vmatprep.subr.bf16.mxu0 0
    %1326 = vmatpush1.bf16.msra.mxu0 0
    %1327 = vmatprep.subr.bf16.mxu0 0
    %1328 = vmatpush1.bf16.msra.mxu0 0
    %1329 = vmatprep.subr.bf16.mxu0 0
    %1330 = vmatpush1.bf16.msra.mxu0 0
    %1331 = vmatprep.subr.bf16.mxu0 0
    %1332 = vmatpush1.bf16.msra.mxu0 0
    %1333 = vmatprep.subr.bf16.mxu0 0
    %1334 = vmatpush1.bf16.msra.mxu0 0
    %1335 = vmatprep.subr.bf16.mxu0 0
    %1336 = vmatpush1.bf16.msra.mxu0 0
    %1337 = vmatprep.subr.bf16.mxu0 0
    %1338 = vmatpush1.bf16.msra.mxu0 0
    %1339 = vmatprep.subr.bf16.mxu0 0
    %1340 = vmatpush1.bf16.msra.mxu0 0
    %1341 = vmatprep.subr.bf16.mxu0 0
    %1342 = vmatpush1.bf16.msra.mxu0 0
    %1343 = vmatprep.subr.bf16.mxu0 0
    %1344 = vmatpush1.bf16.msra.mxu0 0
    %1345 = vmatprep.subr.bf16.mxu0 0
    %1346 = vmatpush1.bf16.msra.mxu0 0
    %1347 = vmatprep.subr.bf16.mxu0 0
    %1348 = vmatpush1.bf16.msra.mxu0 0
    %1349 = vmatprep.subr.bf16.mxu0 0
    %1350 = vmatpush1.bf16.msra.mxu0 0
    %1351 = vmatprep.mubr.bf16.mxu0 0
    %1352 = vmatmul.mubr.bf16.gmra.mrb[0].mxu0 %v1311
    %v1353 = vpop.f32.mrb[0].mxu0
    %v1354 = vadd.f32 0.0, %v1353
    %v1355 = vpop.f32.mrb[0].mxu0
    %v1356 = vpop.f32.mrb[0].mxu0
    %v1357 = vadd.f32 0.0, %v1356
    %v1358 = vpop.f32.mrb[0].mxu0
    %1359 = vmatprep.mubr.bf16.mxu0 0
    %1360 = vmatmul.mubr.bf16.gmra.mrb[0].mxu0 %v1314
    %v1361 = vpop.f32.mrb[0].mxu0
    %v1362 = vadd.f32 0.0, %v1361
    %v1363 = vpop.f32.mrb[0].mxu0
    %v1364 = vpop.f32.mrb[0].mxu0
    %v1365 = vadd.f32 0.0, %v1364
    %v1366 = vpop.f32.mrb[0].mxu0
    %1367 = vmatprep.mubr.bf16.mxu0 0
    %1368 = vmatmul.mubr.bf16.gmra.mrb[0].mxu0 %v1317
    %v1369 = vpop.f32.mrb[0].mxu0
    %v1370 = vadd.f32 0.0, %v1369
    %v1371 = vpop.f32.mrb[0].mxu0
    %v1372 = vpop.f32.mrb[0].mxu0
    %v1373 = vadd.f32 0.0, %v1372
    %v1374 = vpop.f32.mrb[0].mxu0
    %1375 = vdwg.mxu0
    %1376 = vrot.lane.b32.xlu0 %v1354, 1
    %v1377 = vpop.permute.xlu0 %1376
    %1378 = vrot.lane.b32.xlu0 %v1357, 1
    %v1379 = vpop.permute.xlu0 %1378
    %v1380 = vmul.f32 %v1377, %v227
    %v1381 = vmul.f32 %v1379, %v227
    %1382 = vrot.lane.b32.xlu0 %v1370, 127
    %v1383 = vpop.permute.xlu0 %1382
    %1384 = vrot.lane.b32.xlu0 %v1373, 127
    %v1385 = vpop.permute.xlu0 %1384
    %v1386 = vmul.f32 %v1383, %v237
    %v1387 = vmul.f32 %v1385, %v237
    %v1388 = vadd.f32 %v1380, %v1362
    %v1389 = vadd.f32 %v1381, %v1365
    %v1390 = vadd.f32 %v1388, %v1386
    %v1391 = vadd.f32 %v1389, %v1387
    %1392 = vadd.xlane.f32.xlu0 %v1390
    %v1393 = vpop.xlane.xlu0 %1392
    %1394 = vadd.xlane.f32.xlu0 %v1391
    %v1395 = vpop.xlane.xlu0 %1394
    %v1396 = vmul.f32 %v1390, %v1390
    %v1397 = vmul.f32 %v1391, %v1391
    %1398 = vadd.xlane.f32.xlu0 %v1396
    %v1399 = vpop.xlane.xlu0 %1398
    %1400 = vadd.xlane.f32.xlu0 %v1397
    %v1401 = vpop.xlane.xlu0 %1400
    %v1402 = vmul.f32 %v1393, 0.008196721
    %v1403 = vmul.f32 %v1395, 0.008196721
    %v1404 = vmul.f32 %v1399, 0.008196721
    %v1405 = vmul.f32 %v1401, 0.008196721
    %v1406 = vmul.f32 %v1402, %v1402
    %v1407 = vmul.f32 %v1403, %v1403
    %v1408 = vsub.f32 %v1404, %v1406
    %v1409 = vsub.f32 %v1405, %v1407
    %v1410 = vmax.f32 %v1408, 0.0
    %v1411 = vmax.f32 %v1409, 0.0
    %v1412 = vsub.f32 %v1390, %v1402
    %v1413 = vsub.f32 %v1391, %v1403
    %v1414 = vadd.f32 %v1410, 1e-05
    %v1415 = vadd.f32 %v1411, 1e-05
    %v1416 = vrsqrt.pop %v1414
    %v1417 = vrsqrt.pop %v1415
    %v1418 = vmul.f32 %v1412, %v1416
    %v1419 = vmul.f32 %v1413, %v1417
    %1420 = vset.pattern.permute.xlu0 47
    %1421 = vperm.xlu0 %1420, %v264
    %v1422 = vpop.permute.xlu0 %1421
    %1424 = vset.pattern.permute.xlu0 47
    %1425 = vperm.xlu0 %1424, %v265
    %v1426 = vpop.permute.xlu0 %1425
    %v1428 = vmul.f32 %v1418, %v1422
    %v1429 = vmul.f32 %v1419, %v1426
    %1430 = vset.pattern.permute.xlu0 48
    %1431 = vperm.xlu0 %1430, %v264
    %v1432 = vpop.permute.xlu0 %1431
    %1434 = vset.pattern.permute.xlu0 48
    %1435 = vperm.xlu0 %1434, %v265
    %v1436 = vpop.permute.xlu0 %1435
    %v1438 = vadd.f32 %v1428, %v1432
    %v1439 = vadd.f32 %v1429, %v1436
    %v1440 = vmax.f32 %v1438, 0.0
    %v1441 = vmax.f32 %v1439, 0.0
    %v1442 = vmul.f32 %v1440, %v301
    %v1443 = vmul.f32 %v1441, %v301
    %v1444 = vpack.c.bf16 %v1443, %v1442
    %v1445 = vld [vmem:[#allocation4 + $0x24] sm:$0xf]
    %v1446 = vld [vmem:[#allocation4 + $0x4c] sm:$0xf]
    %v1447 = vld [vmem:[#allocation4 + $0x74] sm:$0xf]
    %v1448 = vld [vmem:[#allocation4 + $0x9c] sm:$0xf]
    %v1453 = vunpack.c.l.b16 %v1445
    %v1454 = vunpack.c.l.b16 %v1446
    %v1455 = vunpack.c.l.b16 %v1447
    %v1456 = vunpack.c.l.b16 %v1448
    %v1457 = vpack.c.b16 %v1454, %v1453
    %v1458 = vpack.c.b16 %v1456, %v1455
    %v1460 = vsel %vm476, %v1457, 0
    %v1463 = vsel %vm476, %v1458, 0
    %1465 = vmatprep.subr.bf16.mxu0 0
    %1466 = vmatpush1.bf16.msra.mxu0 %v1131
    %1467 = vmatprep.subr.bf16.mxu0 0
    %1468 = vmatpush1.bf16.msra.mxu0 %v1132
    %1469 = vmatprep.subr.bf16.mxu0 0
    %1470 = vmatpush1.bf16.msra.mxu0 %v1288
    %1471 = vmatprep.subr.bf16.mxu0 0
    %1472 = vmatpush1.bf16.msra.mxu0 %v1444
    %1473 = vmatprep.subr.bf16.mxu0 0
    %1474 = vmatpush1.bf16.msra.mxu0 0
    %1475 = vmatprep.subr.bf16.mxu0 0
    %1476 = vmatpush1.bf16.msra.mxu0 0
    %1477 = vmatprep.subr.bf16.mxu0 0
    %1478 = vmatpush1.bf16.msra.mxu0 0
    %1479 = vmatprep.subr.bf16.mxu0 0
    %1480 = vmatpush1.bf16.msra.mxu0 0
    %1481 = vmatprep.subr.bf16.mxu0 0
    %1482 = vmatpush1.bf16.msra.mxu0 0
    %1483 = vmatprep.subr.bf16.mxu0 0
    %1484 = vmatpush1.bf16.msra.mxu0 0
    %1485 = vmatprep.subr.bf16.mxu0 0
    %1486 = vmatpush1.bf16.msra.mxu0 0
    %1487 = vmatprep.subr.bf16.mxu0 0
    %1488 = vmatpush1.bf16.msra.mxu0 0
    %1489 = vmatprep.subr.bf16.mxu0 0
    %1490 = vmatpush1.bf16.msra.mxu0 0
    %1491 = vmatprep.subr.bf16.mxu0 0
    %1492 = vmatpush1.bf16.msra.mxu0 0
    %1493 = vmatprep.subr.bf16.mxu0 0
    %1494 = vmatpush1.bf16.msra.mxu0 0
    %1495 = vmatprep.subr.bf16.mxu0 0
    %1496 = vmatpush1.bf16.msra.mxu0 0
    %1497 = vmatprep.mubr.bf16.mxu0 0
    %1498 = vmatmul.mubr.bf16.gmra.mrb[0].mxu0 %v1460
    %v1499 = vpop.f32.mrb[0].mxu0
    %v1500 = vadd.f32 0.0, %v1499
    %v1501 = vpop.f32.mrb[0].mxu0
    %v1502 = vpop.f32.mrb[0].mxu0
    %v1503 = vadd.f32 0.0, %v1502
    %v1504 = vpop.f32.mrb[0].mxu0
    %1505 = vmatprep.mubr.bf16.mxu0 0
    %1506 = vmatmul.mubr.bf16.gmra.mrb[0].mxu0 %v1463
    %v1507 = vpop.f32.mrb[0].mxu0
    %v1508 = vadd.f32 0.0, %v1507
    %v1509 = vpop.f32.mrb[0].mxu0
    %v1510 = vpop.f32.mrb[0].mxu0
    %v1511 = vadd.f32 0.0, %v1510
    %v1512 = vpop.f32.mrb[0].mxu0
    %1513 = vdwg.mxu0
    %1514 = vadd.xlane.f32.xlu0 %v1500
    %v1515 = vpop.xlane.xlu0 %1514
    %1516 = vadd.xlane.f32.xlu0 %v1503
    %v1517 = vpop.xlane.xlu0 %1516
    %1518 = vadd.xlane.f32.xlu0 %v1508
    %v1519 = vpop.xlane.xlu0 %1518
    %1520 = vadd.xlane.f32.xlu0 %v1511
    %v1521 = vpop.xlane.xlu0 %1520
    %v1522 = vmul.f32 %v1500, %v1500
    %v1523 = vmul.f32 %v1503, %v1503
    %v1524 = vmul.f32 %v1508, %v1508
    %v1525 = vmul.f32 %v1511, %v1511
    %1526 = vadd.xlane.f32.xlu0 %v1522
    %v1527 = vpop.xlane.xlu0 %1526
    %1528 = vadd.xlane.f32.xlu0 %v1523
    %v1529 = vpop.xlane.xlu0 %1528
    %1530 = vadd.xlane.f32.xlu0 %v1524
    %v1531 = vpop.xlane.xlu0 %1530
    %1532 = vadd.xlane.f32.xlu0 %v1525
    %v1533 = vpop.xlane.xlu0 %1532
    %v1534 = vmul.f32 %v1515, 0.008196721
    %v1535 = vmul.f32 %v1517, 0.008196721
    %v1536 = vmul.f32 %v1519, 0.008196721
    %v1537 = vmul.f32 %v1521, 0.008196721
    %v1538 = vmul.f32 %v1527, 0.008196721
    %v1539 = vmul.f32 %v1529, 0.008196721
    %v1540 = vmul.f32 %v1531, 0.008196721
    %v1541 = vmul.f32 %v1533, 0.008196721
    %v1542 = vmul.f32 %v1534, %v1534
    %v1543 = vmul.f32 %v1535, %v1535
    %v1544 = vmul.f32 %v1536, %v1536
    %v1545 = vmul.f32 %v1537, %v1537
    %v1546 = vsub.f32 %v1538, %v1542
    %v1547 = vsub.f32 %v1539, %v1543
    %v1548 = vsub.f32 %v1540, %v1544
    %v1549 = vsub.f32 %v1541, %v1545
    %v1550 = vmax.f32 %v1546, 0.0
    %v1551 = vmax.f32 %v1547, 0.0
    %v1552 = vmax.f32 %v1548, 0.0
    %v1553 = vmax.f32 %v1549, 0.0
    %v1554 = vsub.f32 %v1500, %v1534
    %v1555 = vsub.f32 %v1503, %v1535
    %v1556 = vsub.f32 %v1508, %v1536
    %v1557 = vsub.f32 %v1511, %v1537
    %v1558 = vadd.f32 %v1550, 1e-05
    %v1559 = vadd.f32 %v1551, 1e-05
    %v1560 = vadd.f32 %v1552, 1e-05
    %v1561 = vadd.f32 %v1553, 1e-05
    %v1562 = vrsqrt.pop %v1558
    %v1563 = vrsqrt.pop %v1559
    %v1564 = vrsqrt.pop %v1560
    %v1565 = vrsqrt.pop %v1561
    %v1566 = vmul.f32 %v1554, %v1562
    %v1567 = vmul.f32 %v1555, %v1563
    %v1568 = vmul.f32 %v1556, %v1564
    %v1569 = vmul.f32 %v1557, %v1565
    %1570 = vset.pattern.permute.xlu0 49
    %1571 = vperm.xlu0 %1570, %v572
    %v1572 = vpop.permute.xlu0 %1571
    %1574 = vset.pattern.permute.xlu0 49
    %1575 = vperm.xlu0 %1574, %v573
    %v1576 = vpop.permute.xlu0 %1575
    %1578 = vset.pattern.permute.xlu0 49
    %1579 = vperm.xlu0 %1578, %v574
    %v1580 = vpop.permute.xlu0 %1579
    %1582 = vset.pattern.permute.xlu0 49
    %1583 = vperm.xlu0 %1582, %v575
    %v1584 = vpop.permute.xlu0 %1583
    %v1586 = vmul.f32 %v1566, %v1572
    %v1587 = vmul.f32 %v1567, %v1576
    %v1588 = vmul.f32 %v1568, %v1580
    %v1589 = vmul.f32 %v1569, %v1584
    %1590 = vset.pattern.permute.xlu0 50
    %1591 = vperm.xlu0 %1590, %v572
    %v1592 = vpop.permute.xlu0 %1591
    %1594 = vset.pattern.permute.xlu0 50
    %1595 = vperm.xlu0 %1594, %v573
    %v1596 = vpop.permute.xlu0 %1595
    %1598 = vset.pattern.permute.xlu0 50
    %1599 = vperm.xlu0 %1598, %v574
    %v1600 = vpop.permute.xlu0 %1599
    %1602 = vset.pattern.permute.xlu0 50
    %1603 = vperm.xlu0 %1602, %v575
    %v1604 = vpop.permute.xlu0 %1603
    %v1606 = vadd.f32 %v1586, %v1592
    %v1607 = vadd.f32 %v1587, %v1596
    %v1608 = vadd.f32 %v1588, %v1600
    %v1609 = vadd.f32 %v1589, %v1604
    %v1610 = vmax.f32 %v1606, 0.0
    %v1611 = vmax.f32 %v1607, 0.0
    %v1612 = vmax.f32 %v1608, 0.0
    %v1613 = vmax.f32 %v1609, 0.0
    %v1614 = vmul.f32 %v1610, %v301
    %v1615 = vmul.f32 %v1611, %v301
    %v1616 = vmul.f32 %v1612, %v301
    %v1617 = vmul.f32 %v1613, %v301
    %1618 = vadd.xlane.f32.xlu0 %v1614
    %v1619 = vpop.xlane.xlu0 %1618
    %1620 = vadd.xlane.f32.xlu0 %v1615
    %v1621 = vpop.xlane.xlu0 %1620
    %1622 = vadd.xlane.f32.xlu0 %v1616
    %v1623 = vpop.xlane.xlu0 %1622
    %1624 = vadd.xlane.f32.xlu0 %v1617
    %v1625 = vpop.xlane.xlu0 %1624
    %v1626 = vmul.f32 %v1614, %v1614
    %v1627 = vmul.f32 %v1615, %v1615
    %v1628 = vmul.f32 %v1616, %v1616
    %v1629 = vmul.f32 %v1617, %v1617
    %1630 = vadd.xlane.f32.xlu0 %v1626
    %v1631 = vpop.xlane.xlu0 %1630
    %1632 = vadd.xlane.f32.xlu0 %v1627
    %v1633 = vpop.xlane.xlu0 %1632
    %1634 = vadd.xlane.f32.xlu0 %v1628
    %v1635 = vpop.xlane.xlu0 %1634
    %1636 = vadd.xlane.f32.xlu0 %v1629
    %v1637 = vpop.xlane.xlu0 %1636
    %v1638 = vmul.f32 %v1619, 0.008196721
    %v1639 = vmul.f32 %v1621, 0.008196721
    %v1640 = vmul.f32 %v1623, 0.008196721
    %v1641 = vmul.f32 %v1625, 0.008196721
    %v1642 = vmul.f32 %v1631, 0.008196721
    %v1643 = vmul.f32 %v1633, 0.008196721
    %v1644 = vmul.f32 %v1635, 0.008196721
    %v1645 = vmul.f32 %v1637, 0.008196721
    %v1646 = vmul.f32 %v1638, %v1638
    %v1647 = vmul.f32 %v1639, %v1639
    %v1648 = vmul.f32 %v1640, %v1640
    %v1649 = vmul.f32 %v1641, %v1641
    %v1650 = vsub.f32 %v1642, %v1646
    %v1651 = vsub.f32 %v1643, %v1647
    %v1652 = vsub.f32 %v1644, %v1648
    %v1653 = vsub.f32 %v1645, %v1649
    %v1654 = vmax.f32 %v1650, 0.0
    %v1655 = vmax.f32 %v1651, 0.0
    %v1656 = vmax.f32 %v1652, 0.0
    %v1657 = vmax.f32 %v1653, 0.0
    %v1658 = vsub.f32 %v1614, %v1638
    %v1659 = vsub.f32 %v1615, %v1639
    %v1660 = vsub.f32 %v1616, %v1640
    %v1661 = vsub.f32 %v1617, %v1641
    %v1662 = vadd.f32 %v1654, 1e-05
    %v1663 = vadd.f32 %v1655, 1e-05
    %v1664 = vadd.f32 %v1656, 1e-05
    %v1665 = vadd.f32 %v1657, 1e-05
    %v1666 = vrsqrt.pop %v1662
    %v1667 = vrsqrt.pop %v1663
    %v1668 = vrsqrt.pop %v1664
    %v1669 = vrsqrt.pop %v1665
    %v1670 = vmul.f32 %v1658, %v1666
    %v1671 = vmul.f32 %v1659, %v1667
    %v1672 = vmul.f32 %v1660, %v1668
    %v1673 = vmul.f32 %v1661, %v1669
    %1674 = vset.pattern.permute.xlu0 51
    %1675 = vperm.xlu0 %1674, %v572
    %v1676 = vpop.permute.xlu0 %1675
    %1678 = vset.pattern.permute.xlu0 51
    %1679 = vperm.xlu0 %1678, %v573
    %v1680 = vpop.permute.xlu0 %1679
    %1682 = vset.pattern.permute.xlu0 51
    %1683 = vperm.xlu0 %1682, %v574
    %v1684 = vpop.permute.xlu0 %1683
    %1686 = vset.pattern.permute.xlu0 51
    %1687 = vperm.xlu0 %1686, %v575
    %v1688 = vpop.permute.xlu0 %1687
    %v1690 = vmul.f32 %v1670, %v1676
    %v1691 = vmul.f32 %v1671, %v1680
    %v1692 = vmul.f32 %v1672, %v1684
    %v1693 = vmul.f32 %v1673, %v1688
    %1694 = vset.pattern.permute.xlu0 52
    %1695 = vperm.xlu0 %1694, %v572
    %v1696 = vpop.permute.xlu0 %1695
    %1698 = vset.pattern.permute.xlu0 52
    %1699 = vperm.xlu0 %1698, %v573
    %v1700 = vpop.permute.xlu0 %1699
    %1702 = vset.pattern.permute.xlu0 52
    %1703 = vperm.xlu0 %1702, %v574
    %v1704 = vpop.permute.xlu0 %1703
    %1706 = vset.pattern.permute.xlu0 52
    %1707 = vperm.xlu0 %1706, %v575
    %v1708 = vpop.permute.xlu0 %1707
    %v1710 = vadd.f32 %v1690, %v1696
    %v1711 = vadd.f32 %v1691, %v1700
    %v1712 = vadd.f32 %v1692, %v1704
    %v1713 = vadd.f32 %v1693, %v1708
    %v1714 = vmax.f32 %v1710, 0.0
    %v1715 = vmax.f32 %v1711, 0.0
    %v1716 = vmax.f32 %v1712, 0.0
    %v1717 = vmax.f32 %v1713, 0.0
    %v1718 = vmul.f32 %v1714, %v301
    %v1719 = vmul.f32 %v1715, %v301
    %v1720 = vmul.f32 %v1716, %v301
    %v1721 = vmul.f32 %v1717, %v301
    %v1722 = vsel %vm153, %v572, 0
    %v1724 = vsel %vm153, %v573, 0
    %v1726 = vsel %vm153, %v574, 0
    %v1728 = vsel %vm153, %v575, 0
    %1730 = vmatprep.subr.mxu0 0.0
    %1731 = vmatpush1.msra.mxu0 %v1718
    %1732 = vmatprep.subr.mxu0 0.0
    %1733 = vmatpush1.msra.mxu0 %v1719
    %1734 = vmatprep.subr.mxu0 0.0
    %1735 = vmatpush1.msra.mxu0 %v1720
    %1736 = vmatprep.subr.mxu0 0.0
    %1737 = vmatpush1.msra.mxu0 %v1721
    %1738 = vmatprep.subr.mxu0 0.0
    %1739 = vmatpush1.msra.mxu0 0.0
    %1740 = vmatprep.subr.mxu0 0.0
    %1741 = vmatpush1.msra.mxu0 0.0
    %1742 = vmatprep.subr.mxu0 0.0
    %1743 = vmatpush1.msra.mxu0 0.0
    %1744 = vmatprep.subr.mxu0 0.0
    %1745 = vmatpush1.msra.mxu0 0.0
    %1746 = vmatprep.subr.mxu0 0.0
    %1747 = vmatpush1.msra.mxu0 0.0
    %1748 = vmatprep.subr.mxu0 0.0
    %1749 = vmatpush1.msra.mxu0 0.0
    %1750 = vmatprep.subr.mxu0 0.0
    %1751 = vmatpush1.msra.mxu0 0.0
    %1752 = vmatprep.subr.mxu0 0.0
    %1753 = vmatpush1.msra.mxu0 0.0
    %1754 = vmatprep.subr.mxu0 0.0
    %1755 = vmatpush1.msra.mxu0 0.0
    %1756 = vmatprep.subr.mxu0 0.0
    %1757 = vmatpush1.msra.mxu0 0.0
    %1758 = vmatprep.subr.mxu0 0.0
    %1759 = vmatpush1.msra.mxu0 0.0
    %1760 = vmatprep.subr.mxu0 0.0
    %1761 = vmatpush1.msra.mxu0 0.0
    %1762 = vmatprep.subr.mxu0 0.0
    %1763 = vmatpush1.msra.mxu0 0.0
    %1764 = vmatprep.subr.mxu0 0.0
    %1765 = vmatpush1.msra.mxu0 0.0
    %1766 = vmatprep.subr.mxu0 0.0
    %1767 = vmatpush1.msra.mxu0 0.0
    %1768 = vmatprep.subr.mxu0 0.0
    %1769 = vmatpush1.msra.mxu0 0.0
    %1770 = vmatprep.subr.mxu0 0.0
    %1771 = vmatpush1.msra.mxu0 0.0
    %1772 = vmatprep.subr.mxu0 0.0
    %1773 = vmatpush1.msra.mxu0 0.0
    %1774 = vmatprep.subr.mxu0 0.0
    %1775 = vmatpush1.msra.mxu0 0.0
    %1776 = vmatprep.subr.mxu0 0.0
    %1777 = vmatpush1.msra.mxu0 0.0
    %1778 = vmatprep.subr.mxu0 0.0
    %1779 = vmatpush1.msra.mxu0 0.0
    %1780 = vmatprep.subr.mxu0 0.0
    %1781 = vmatpush1.msra.mxu0 0.0
    %1782 = vmatprep.subr.mxu0 0.0
    %1783 = vmatpush1.msra.mxu0 0.0
    %1784 = vmatprep.subr.mxu0 0.0
    %1785 = vmatpush1.msra.mxu0 0.0
    %1786 = vmatprep.subr.mxu0 0.0
    %1787 = vmatpush1.msra.mxu0 0.0
    %1788 = vmatprep.subr.mxu0 0.0
    %1789 = vmatpush1.msra.mxu0 0.0
    %1790 = vmatprep.subr.mxu0 0.0
    %1791 = vmatpush1.msra.mxu0 0.0
    %1792 = vmatprep.subr.mxu0 0.0
    %1793 = vmatpush1.msra.mxu0 0.0
    %1794 = vmatprep.mubr.f32.mxu0 0.0
    %1795 = vmatmul.mubr.f32.gmra.mrb[0].mxu0 %v1722
    %v1796 = vpop.f32.mrb[0].mxu0
    %v1797 = vadd.f32 0.0, %v1796
    %v1798 = vpop.f32.mrb[0].mxu0
    %1799 = vmatprep.mubr.f32.mxu0 0.0
    %1800 = vmatmul.mubr.f32.gmra.mrb[0].mxu0 %v1724
    %v1801 = vpop.f32.mrb[0].mxu0
    %v1802 = vadd.f32 0.0, %v1801
    %v1803 = vpop.f32.mrb[0].mxu0
    %1804 = vmatprep.mubr.f32.mxu0 0.0
    %1805 = vmatmul.mubr.f32.gmra.mrb[0].mxu0 %v1726
    %v1806 = vpop.f32.mrb[0].mxu0
    %v1807 = vadd.f32 0.0, %v1806
    %v1808 = vpop.f32.mrb[0].mxu0
    %1809 = vmatprep.mubr.f32.mxu0 0.0
    %1810 = vmatmul.mubr.f32.gmra.mrb[0].mxu0 %v1728
    %v1811 = vpop.f32.mrb[0].mxu0
    %v1812 = vadd.f32 0.0, %v1811
    %v1813 = vpop.f32.mrb[0].mxu0
    %1814 = vdwg.mxu0
    %v1815 = vld [vmem:[#allocation2] sm:$0xff]
    %v1816 = vld [vmem:[#allocation2 + $0x8] sm:$0xff]
    %v1817 = vld [vmem:[#allocation2 + $0x10] sm:$0xff]
    %v1818 = vld [vmem:[#allocation2 + $0x18] sm:$0xff]
    %v1819 = vld [vmem:[#allocation2 + $0x20] sm:$0xff]
    %v1820 = vld [vmem:[#allocation2 + $0x28] sm:$0xff]
    %v1821 = vld [vmem:[#allocation2 + $0x30] sm:$0xff]
    %v1822 = vld [vmem:[#allocation2 + $0x38] sm:$0xff]
    %v1823 = vld [vmem:[#allocation2 + $0x40] sm:$0xff]
    %v1824 = vld [vmem:[#allocation2 + $0x48] sm:$0xff]
    %v1825 = vld [vmem:[#allocation2 + $0x50] sm:$0xff]
    %v1826 = vld [vmem:[#allocation2 + $0x58] sm:$0xff]
    %v1827 = vld [vmem:[#allocation2 + $0x60] sm:$0xff]
    %v1828 = vld [vmem:[#allocation2 + $0x68] sm:$0xff]
    %v1829 = vld [vmem:[#allocation2 + $0x70] sm:$0xff]
    %v1830 = vld [vmem:[#allocation2 + $0x78] sm:$0xff]
    %1831 = vset.pattern.permute.xlu0 32
    %1832 = vperm.xlu0 %1831, %v572
    %v1833 = vpop.permute.xlu0 %1832
    %1835 = vset.pattern.permute.xlu0 32
    %1836 = vperm.xlu0 %1835, %v573
    %v1837 = vpop.permute.xlu0 %1836
    %1839 = vset.pattern.permute.xlu0 32
    %1840 = vperm.xlu0 %1839, %v574
    %v1841 = vpop.permute.xlu0 %1840
    %1843 = vset.pattern.permute.xlu0 32
    %1844 = vperm.xlu0 %1843, %v575
    %v1845 = vpop.permute.xlu0 %1844
    %1847 = vmatprep.subr.mxu0 0.0
    %1848 = vmatpush1.msra.mxu0 %v1815
    %1849 = vmatprep.subr.mxu0 0.0
    %1850 = vmatpush1.msra.mxu0 %v1816
    %1851 = vmatprep.subr.mxu0 0.0
    %1852 = vmatpush1.msra.mxu0 %v1817
    %1853 = vmatprep.subr.mxu0 0.0
    %1854 = vmatpush1.msra.mxu0 %v1818
    %1855 = vmatprep.subr.mxu0 0.0
    %1856 = vmatpush1.msra.mxu0 %v1819
    %1857 = vmatprep.subr.mxu0 0.0
    %1858 = vmatpush1.msra.mxu0 %v1820
    %1859 = vmatprep.subr.mxu0 0.0
    %1860 = vmatpush1.msra.mxu0 %v1821
    %1861 = vmatprep.subr.mxu0 0.0
    %1862 = vmatpush1.msra.mxu0 %v1822
    %1863 = vmatprep.subr.mxu0 0.0
    %1864 = vmatpush1.msra.mxu0 %v1823
    %1865 = vmatprep.subr.mxu0 0.0
    %1866 = vmatpush1.msra.mxu0 %v1824
    %1867 = vmatprep.subr.mxu0 0.0
    %1868 = vmatpush1.msra.mxu0 %v1825
    %1869 = vmatprep.subr.mxu0 0.0
    %1870 = vmatpush1.msra.mxu0 %v1826
    %1871 = vmatprep.subr.mxu0 0.0
    %1872 = vmatpush1.msra.mxu0 %v1827
    %1873 = vmatprep.subr.mxu0 0.0
    %1874 = vmatpush1.msra.mxu0 %v1828
    %1875 = vmatprep.subr.mxu0 0.0
    %1876 = vmatpush1.msra.mxu0 %v1829
    %1877 = vmatprep.subr.mxu0 0.0
    %1878 = vmatpush1.msra.mxu0 %v1830
    %1879 = vmatprep.subr.mxu0 0.0
    %1880 = vmatpush1.msra.mxu0 0.0
    %1881 = vmatprep.subr.mxu0 0.0
    %1882 = vmatpush1.msra.mxu0 0.0
    %1883 = vmatprep.subr.mxu0 0.0
    %1884 = vmatpush1.msra.mxu0 0.0
    %1885 = vmatprep.subr.mxu0 0.0
    %1886 = vmatpush1.msra.mxu0 0.0
    %1887 = vmatprep.subr.mxu0 0.0
    %1888 = vmatpush1.msra.mxu0 0.0
    %1889 = vmatprep.subr.mxu0 0.0
    %1890 = vmatpush1.msra.mxu0 0.0
    %1891 = vmatprep.subr.mxu0 0.0
    %1892 = vmatpush1.msra.mxu0 0.0
    %1893 = vmatprep.subr.mxu0 0.0
    %1894 = vmatpush1.msra.mxu0 0.0
    %1895 = vmatprep.subr.mxu0 0.0
    %1896 = vmatpush1.msra.mxu0 0.0
    %1897 = vmatprep.subr.mxu0 0.0
    %1898 = vmatpush1.msra.mxu0 0.0
    %1899 = vmatprep.subr.mxu0 0.0
    %1900 = vmatpush1.msra.mxu0 0.0
    %1901 = vmatprep.subr.mxu0 0.0
    %1902 = vmatpush1.msra.mxu0 0.0
    %1903 = vmatprep.subr.mxu0 0.0
    %1904 = vmatpush1.msra.mxu0 0.0
    %1905 = vmatprep.subr.mxu0 0.0
    %1906 = vmatpush1.msra.mxu0 0.0
    %1907 = vmatprep.subr.mxu0 0.0
    %1908 = vmatpush1.msra.mxu0 0.0
    %1909 = vmatprep.subr.mxu0 0.0
    %1910 = vmatpush1.msra.mxu0 0.0
    %1911 = vmatprep.mubr.f32.mxu0 0.0
    %1912 = vmatmul.mubr.f32.gmra.mrb[0].mxu0 %v1797
    %v1913 = vpop.f32.mrb[0].mxu0
    %v1914 = vadd.f32 %v1833, %v1913
    %v1915 = vpop.f32.mrb[0].mxu0
    %1916 = vmatprep.mubr.f32.mxu0 0.0
    %1917 = vmatmul.mubr.f32.gmra.mrb[0].mxu0 %v1802
    %v1918 = vpop.f32.mrb[0].mxu0
    %v1919 = vadd.f32 %v1837, %v1918
    %v1920 = vpop.f32.mrb[0].mxu0
    %1921 = vmatprep.mubr.f32.mxu0 0.0
    %1922 = vmatmul.mubr.f32.gmra.mrb[0].mxu0 %v1807
    %v1923 = vpop.f32.mrb[0].mxu0
    %v1924 = vadd.f32 %v1841, %v1923
    %v1925 = vpop.f32.mrb[0].mxu0
    %1926 = vmatprep.mubr.f32.mxu0 0.0
    %1927 = vmatmul.mubr.f32.gmra.mrb[0].mxu0 %v1812
    %v1928 = vpop.f32.mrb[0].mxu0
    %v1929 = vadd.f32 %v1845, %v1928
    %v1930 = vpop.f32.mrb[0].mxu0
    %1931 = vdwg.mxu0
    %1932 = vst [vmem:[%s5] sm:$0xff] %v1914
    %1933 = vst [vmem:[%s5 + $0x8] sm:$0xff] %v1919
    %1934 = vst [vmem:[%s5 + $0x10] sm:$0xff] %v1924
    %1935 = vst [vmem:[%s5 + $0x18] sm:$0xff] %v1929
    // Predicated region
    $region30: #{densenet_forward.1} parent=1 // pred_check
      _
    $region31: #{densenet_forward.1} parent=1 // pred_check_branch
      %1937 = sbr.rel (0) target = $region33
    $region32: #{densenet_forward.1} parent=1 // pred_region
      _
    $region33: #{densenet_forward.1} parent=1 // pred_fallthru
      _
    // Predicated region
    $region34: #{densenet_forward.1} parent=1 // pred_check
      _
    $region35: #{densenet_forward.1} parent=1 // pred_check_branch
      %1939 = sbr.rel (0) target = $region37
    $region36: #{densenet_forward.1} parent=1 // pred_region
      _
    $region37: #{densenet_forward.1} parent=1 // pred_fallthru
      _
    %1940 = vsyncpa [#allocation3], 1
    %1941 = vsyncpa [#allocation5], 1

</llo_original>
